<compile_context>
chip_gen: v7x
topology: tpu7x:2x2x1
jax: 0.10.0
libtpu: 0.0.40
codegen_flags: <defaults>
</compile_context>

<pallas_src>
import jax
import jax.numpy as jnp
from jax import lax
from jax.experimental import pallas as pl
from jax.experimental.pallas import tpu as pltpu

# ----------------- config consistent with the module's __init__ -----------------
D_MODEL = 32                       # config.d_model
D_XB = 16                          # config.d_xb
D_INNER = 64                       # config.d_inner
D_INTER = 64                       # config.intermediate_size
HEADDIM = 16
NHEADS = D_INNER // HEADDIM        # 4
NKV = D_XB // HEADDIM              # 1
HEADS_PER_KV = NHEADS // NKV       # 4
D_STATE = HEADDIM                  # 16
D_CONV = 4
CONV_DIM = 2 * D_XB + D_INNER      # conv over [x, B, C] = 96
D_IN_PROJ = 2 * D_INNER + 2 * D_XB + NHEADS   # [z, x, B, C, dt] = 164
RMS_EPS = 1e-5

BATCH = 2
SEQLEN = 8
ROWS = BATCH * SEQLEN              # batch folded into the sublane/row dimension

# packed-weight layout (128-aligned lane groups)
W32_COLS = 384                     # [xBC 0:96 | pad | z 128:192 | dt 192:196 | pad | gate 256:320 | up 320:384]
W64_COLS = 2 * D_MODEL             # [w_out 0:32 | w_down 32:64]
PRM_ROWS, PRM_COLS = 16, 128       # small-parameter slab (PRM_ROWS == ROWS for the mask columns)
CMASK_COL = 96                     # conv position masks live at cols 96:96+D_CONV
TRI_COL = 112                      # block-diag causal mask lives at cols 112:112+ROWS


def _silu(x):
    return x * (1.0 / (1.0 + jnp.exp(-x)))


def _softplus(x):
    # numerically stable softplus
    return jnp.maximum(x, 0.0) + jnp.log1p(jnp.exp(-jnp.abs(x)))


def _rms(x, w):
    return x * lax.rsqrt(jnp.mean(x * x, axis=-1, keepdims=True) + RMS_EPS) * w


# =============================== fused Pallas kernel ===============================

def mamba_layer_kernel(h_ref, w32_ref, w64_ref, prm_ref, o_ref):
    R = ROWS

    # ---- packed small parameters (one (16,128) VMEM slab, static views) ----
    ln1 = prm_ref[0:1, 0:D_MODEL]
    ln2 = prm_ref[1:2, 0:D_MODEL]
    gn = prm_ref[2:3, 0:D_INNER]
    conv_b = prm_ref[3:4, 0:CONV_DIM]
    dt_bias = prm_ref[4:5, 0:NHEADS]
    a_neg = prm_ref[5:6, 0:NHEADS]                     # A = -exp(A_log)
    d_lanes = prm_ref[6:7, 0:D_INNER]                  # D repeated per headdim
    conv_w = prm_ref[8:8 + D_CONV, 0:CONV_DIM]
    conv_mask = prm_ref[:, CMASK_COL:CMASK_COL + D_CONV]      # (R, D_CONV) per-seq shift masks
    tri = prm_ref[:, TRI_COL:TRI_COL + ROWS]                  # (R, R) block-diag causal mask

    h = h_ref[...]                                             # (R, D_MODEL), residual in fp32

    # ---- input RMSNorm + fused in_proj (single lane-dense matmul, 128-aligned groups) ----
    xn = _rms(h, ln1)
    proj = jnp.dot(xn, w32_ref[:, 0:256], preferred_element_type=jnp.float32)   # (R, 256)
    xbc = proj[:, 0:CONV_DIM]                                  # [x | B | C]  (R, 96)
    z = proj[:, 128:128 + D_INNER]                             # (R, 64)
    dt_raw = proj[:, 192:192 + NHEADS]                         # (R, 4)

    # ---- causal depthwise conv1d + SiLU: shifted slices + VPU FMA (no MXU) ----
    xbc_pad = jnp.concatenate(
        [jnp.zeros((8, CONV_DIM), jnp.float32), xbc], axis=0)  # sublane-aligned zero pad
    acc = jnp.zeros((R, CONV_DIM), jnp.float32) + conv_b
    for s in range(D_CONV):                                    # tap D_CONV-1-s reads x[t-s]
        xs = xbc_pad[8 - s:8 - s + R, :]                       # x shifted down by s rows
        xs = xs * conv_mask[:, s:s + 1]                        # zero at each sequence start
        acc = acc + xs * conv_w[D_CONV - 1 - s:D_CONV - s, :]
    xbc_c = _silu(acc)
    x_c = xbc_c[:, :D_XB]
    b_c = xbc_c[:, D_XB:2 * D_XB]
    c_c = xbc_c[:, 2 * D_XB:]

    # ---- Mamba2 SSD (quadratic 1-SS form), all heads batched ----
    dt_all = _softplus(dt_raw + dt_bias)                       # (R, H)
    a_all = dt_all * a_neg                                     # (R, H), <= 0

    # per-sequence inclusive cumsum for every head in ONE matmul
    cum = jnp.dot(tri, a_all, preferred_element_type=jnp.float32)   # (R, H)
    cum_h = jnp.transpose(cum)                                 # (H, R)
    diff = cum_h[:, :, None] - cum_h[:, None, :]               # (H, R, R)
    decay = jnp.exp(jnp.minimum(diff, 0.0)) * tri[None, :, :]  # clamp + block-diag causal mask

    # GQA: head hd shares x/B of kv group hd // HEADS_PER_KV; dt folded into B
    kv_sl = [slice((hd // HEADS_PER_KV) * HEADDIM, (hd // HEADS_PER_KV + 1) * HEADDIM)
             for hd in range(NHEADS)]
    x_heads = jnp.stack([x_c[:, kv_sl[hd]] for hd in range(NHEADS)], axis=0)          # (H,R,P)
    bdt_heads = jnp.stack([b_c[:, kv_sl[hd]] * dt_all[:, hd:hd + 1]
                           for hd in range(NHEADS)], axis=0)                           # (H,R,N)
    c_heads = jnp.stack([c_c[:, hd * D_STATE:(hd + 1) * D_STATE]
                         for hd in range(NHEADS)], axis=0)                             # (H,R,N)

    scores = jnp.einsum('htd,hsd->hts', c_heads, bdt_heads,
                        preferred_element_type=jnp.float32)                            # (H,R,R)
    y_heads = jnp.einsum('hts,hsp->htp', decay * scores, x_heads,
                         preferred_element_type=jnp.float32)                           # (H,R,P)

    # ---- heads -> lanes, D skip, gated RMSNorm, ONE out_proj matmul, residual ----
    y_full = jnp.concatenate([y_heads[hd] for hd in range(NHEADS)], axis=-1)           # (R, 64)
    x_full = jnp.concatenate([x_c[:, kv_sl[hd]] for hd in range(NHEADS)], axis=-1)     # (R, 64)
    gated = (y_full + x_full * d_lanes) * _silu(z)
    inv = lax.rsqrt(jnp.mean(gated * gated, axis=-1, keepdims=True) + RMS_EPS)
    yn = gated * inv * gn
    h1 = h + jnp.dot(yn, w64_ref[:, 0:D_MODEL], preferred_element_type=jnp.float32)

    # ---- post-attention RMSNorm + MLP (fused gate|up matmul) + residual ----
    hn = _rms(h1, ln2)
    gu = jnp.dot(hn, w32_ref[:, 256:384], preferred_element_type=jnp.float32)          # (R, 128)
    mlp = _silu(gu[:, :D_INTER]) * gu[:, D_INTER:]
    o_ref[...] = h1 + jnp.dot(mlp, w64_ref[:, D_MODEL:2 * D_MODEL],
                              preferred_element_type=jnp.float32)


# ============================ wrapper / pallas_call ============================

def prepare_kernel_params(p):
    """One-time re-layout of module parameters into 3 lane-dense slabs."""
    w_in = p["w_in"]                                           # (D_MODEL, 164) = [z|x|B|C|dt]
    w_z = w_in[:, :D_INNER]
    w_xbc = w_in[:, D_INNER:D_INNER + CONV_DIM]
    w_dt = w_in[:, D_INNER + CONV_DIM:]
    zpad = lambda n: jnp.zeros((D_MODEL, n), jnp.float32)
    # [xBC | pad->128 | z | dt | pad->256 | gate | up]: 128-aligned column groups
    w32 = jnp.concatenate(
        [w_xbc, zpad(128 - CONV_DIM), w_z, w_dt,
         zpad(128 - D_INNER - NHEADS), p["w_gate"], p["w_up"]], axis=1)
    assert w32.shape == (D_MODEL, W32_COLS)

    w64 = jnp.concatenate([p["w_out"], p["w_down"]], axis=1)   # (64, 64)

    # small-parameter slab (+ precomputed block-diagonal causal / conv masks)
    prm = jnp.zeros((PRM_ROWS, PRM_COLS), jnp.float32)
    prm = prm.at[0, :D_MODEL].set(p["ln1_w"][0])
    prm = prm.at[1, :D_MODEL].set(p["ln2_w"][0])
    prm = prm.at[2, :D_INNER].set(p["gn_w"][0])
    prm = prm.at[3, :CONV_DIM].set(p["conv_b"][0])
    prm = prm.at[4, :NHEADS].set(p["dt_bias"])
    prm = prm.at[5, :NHEADS].set(-jnp.exp(p["A_log"]))
    prm = prm.at[6, :D_INNER].set(jnp.repeat(p["D"], HEADDIM))
    prm = prm.at[8:8 + D_CONV, :CONV_DIM].set(p["conv_w"])

    r_idx = jnp.arange(ROWS)
    pos = r_idx % SEQLEN
    conv_mask = (pos[:, None] >= jnp.arange(D_CONV)[None, :]).astype(jnp.float32)
    prm = prm.at[:, CMASK_COL:CMASK_COL + D_CONV].set(conv_mask)
    same_seq = (r_idx[:, None] // SEQLEN) == (r_idx[None, :] // SEQLEN)
    causal = (r_idx[:, None] >= r_idx[None, :]) & same_seq
    prm = prm.at[:, TRI_COL:TRI_COL + ROWS].set(causal.astype(jnp.float32))

    return {"w32": w32, "w64": w64, "prm": prm}


def mamba_decoder_layer_pallas(hidden, kp):
    bsz, L, dm = hidden.shape
    rows = bsz * L
    h2 = hidden.reshape(rows, dm).astype(jnp.float32)          # residual_in_fp32, batch in rows

    out = pl.pallas_call(
        mamba_layer_kernel,
        out_shape=jax.ShapeDtypeStruct((rows, dm), jnp.float32),
        # The whole (B*L, d_model) activation fits one block at this toy size, so a
        # single grid step; at real sizes, tile rows (multiples of L) and mark the
        # row axis "parallel" so each TensorCore gets >=2 blocks to pipeline.
        grid=(1,),
        in_specs=[
            pl.BlockSpec((rows, dm), lambda i: (0, 0)),                 # hidden (B*L, d_model)
            pl.BlockSpec((D_MODEL, W32_COLS), lambda i: (0, 0)),        # fused in_proj | gate|up
            pl.BlockSpec((D_INNER, W64_COLS), lambda i: (0, 0)),        # w_out | w_down
            pl.BlockSpec((PRM_ROWS, PRM_COLS), lambda i: (0, 0)),       # packed small params
        ],
        out_specs=pl.BlockSpec((rows, dm), lambda i: (0, 0)),
        compiler_params=pltpu.CompilerParams(
            dimension_semantics=("arbitrary",)),
    )(h2, kp["w32"], kp["w64"], kp["prm"])

    # TODO(synk): past_key_value cache update has no Pallas equivalent; tuple shape kept.
    return out.reshape(bsz, L, dm), None, None


# ============================= pure-JAX reference =============================

def _split_zxbcdt(zxbcdt):
    z = zxbcdt[:, :D_INNER]
    x = zxbcdt[:, D_INNER:D_INNER + D_XB]
    b = zxbcdt[:, D_INNER + D_XB:D_INNER + 2 * D_XB]
    c = zxbcdt[:, D_INNER + 2 * D_XB:2 * D_INNER + 2 * D_XB]
    dt = zxbcdt[:, 2 * D_INNER + 2 * D_XB:]
    return z, x, b, c, dt


def _to_heads(x_c, b_c, c_c, dt_raw, bsz, L):
    G = bsz * NHEADS
    xh = x_c.reshape(bsz, L, NKV, HEADDIM)
    xh = jnp.repeat(xh, HEADS_PER_KV, axis=2).transpose(0, 2, 1, 3).reshape(G, L, HEADDIM)
    bh = b_c.reshape(bsz, L, NKV, D_STATE)
    bh = jnp.repeat(bh, HEADS_PER_KV, axis=2).transpose(0, 2, 1, 3).reshape(G, L, D_STATE)
    ch = c_c.reshape(bsz, L, NHEADS, D_STATE).transpose(0, 2, 1, 3).reshape(G, L, D_STATE)
    dth = dt_raw.reshape(bsz, L, NHEADS).transpose(0, 2, 1).reshape(G, L)
    return xh, bh, ch, dth


def _ssd_reference(x, bm, cm, dt, a, dv):
    def per_head(xh, bh, chh, dth, ah, dh):
        P, N = xh.shape[1], bh.shape[1]

        def step(hs, inp):
            xt, bt, ct, dtt = inp
            hs = jnp.exp(dtt * ah) * hs + dtt * jnp.outer(xt, bt)
            return hs, hs @ ct + dh * xt

        _, ys = lax.scan(step, jnp.zeros((P, N), jnp.float32), (xh, bh, chh, dth))
        return ys

    return jax.vmap(per_head)(x, bm, cm, dt, a, dv)


def mamba_decoder_layer_ref(hidden, p):
    bsz, L, dm = hidden.shape
    BL = bsz * L

    def rms(x, w):
        return x * lax.rsqrt(jnp.mean(x * x, axis=-1, keepdims=True) + RMS_EPS) * w

    h2 = hidden.reshape(BL, dm).astype(jnp.float32)
    zxbcdt = rms(h2, p["ln1_w"]) @ p["w_in"]
    z, x_raw, b_raw, c_raw, dt_raw = _split_zxbcdt(zxbcdt)

    xbc = jnp.concatenate([x_raw, b_raw, c_raw], axis=-1).reshape(bsz, L, CONV_DIM)
    xp = jnp.pad(xbc, ((0, 0), (D_CONV - 1, 0), (0, 0)))
    acc = jnp.zeros((bsz, L, CONV_DIM), jnp.float32) + p["conv_b"][None, :, :]
    for k in range(D_CONV):
        acc = acc + xp[:, k:k + L, :] * p["conv_w"][k][None, None, :]
    xbc_c = _silu(acc)
    x_c, b_c, c_c = xbc_c[..., :D_XB], xbc_c[..., D_XB:2 * D_XB], xbc_c[..., 2 * D_XB:]

    xh, bh, ch, dth = _to_heads(x_c, b_c, c_c, dt_raw, bsz, L)
    dtb = jnp.tile(p["dt_bias"], bsz)
    a_g = -jnp.exp(jnp.tile(p["A_log"], bsz))
    d_g = jnp.tile(p["D"], bsz)
    dt = _softplus(dth + dtb[:, None])
    yh = _ssd_reference(xh, bh, ch, dt, a_g, d_g)
    y2 = yh.reshape(bsz, NHEADS, L, HEADDIM).transpose(0, 2, 1, 3).reshape(BL, D_INNER)

    yz = rms(y2 * _silu(z), p["gn_w"])
    h_after = h2 + yz @ p["w_out"]

    hn2 = rms(h_after, p["ln2_w"])
    out = h_after + (_silu(hn2 @ p["w_gate"]) * (hn2 @ p["w_up"])) @ p["w_down"]
    return out.reshape(bsz, L, dm), None, None


# =============================== param init ===============================

def init_params(key):
    ks = jax.random.split(key, 8)

    def lin(k, fan_in, fan_out):
        return jax.random.normal(k, (fan_in, fan_out), jnp.float32) / jnp.sqrt(float(fan_in))

    return {
        "ln1_w": jnp.ones((1, D_MODEL), jnp.float32),
        "ln2_w": jnp.ones((1, D_MODEL), jnp.float32),
        "w_in": lin(ks[0], D_MODEL, D_IN_PROJ),
        "conv_w": 0.3 * jax.random.normal(ks[1], (D_CONV, CONV_DIM), jnp.float32),
        "conv_b": jnp.zeros((1, CONV_DIM), jnp.float32),
        "dt_bias": jnp.linspace(-2.0, -0.5, NHEADS).astype(jnp.float32),
        "A_log": jnp.log(jnp.linspace(1.0, 4.0, NHEADS)).astype(jnp.float32),
        "D": jnp.ones((NHEADS,), jnp.float32),
        "gn_w": jnp.ones((1, D_INNER), jnp.float32),
        "w_out": lin(ks[2], D_INNER, D_MODEL),
        "w_gate": lin(ks[3], D_MODEL, D_INTER),
        "w_up": lin(ks[4], D_MODEL, D_INTER),
        "w_down": lin(ks[5], D_INTER, D_MODEL),
    }


if __name__ == "__main__":
    key = jax.random.PRNGKey(0)
    kparam_key, kx = jax.random.split(key)
    params = init_params(kparam_key)
    hidden_states = jax.random.normal(kx, (BATCH, SEQLEN, D_MODEL), jnp.float32)

    kernel_params = prepare_kernel_params(params)
    out, _, _ = mamba_decoder_layer_pallas(hidden_states, kernel_params)
    out = jax.block_until_ready(out)
    assert out.shape == (BATCH, SEQLEN, D_MODEL)

    ref, _, _ = mamba_decoder_layer_ref(hidden_states, params)
    if not bool(jnp.allclose(out, ref, rtol=2e-3, atol=2e-3)):
        raise SystemExit(
            "mismatch vs reference: max abs diff = %g" % float(jnp.max(jnp.abs(out - ref))))

    print("KERNEL_OK")
</pallas_src>

<mosaic_0001>
module attributes {stable_mosaic.version = 11 : i64} {
  func.func @mamba_layer_kernel(%arg0: i32, %arg1: memref<16x32xf32, #tpu.memory_space<vmem>>, %arg2: memref<32x384xf32, #tpu.memory_space<vmem>>, %arg3: memref<64x64xf32, #tpu.memory_space<vmem>>, %arg4: memref<16x128xf32, #tpu.memory_space<vmem>>, %arg5: memref<16x32xf32, #tpu.memory_space<vmem>>) attributes {dimension_semantics = [#tpu.dimension_semantics<arbitrary>], iteration_bounds = array<i64: 1>, scalar_prefetch = 0 : i64, scratch_operands = 0 : i64, tpu.core_type = #tpu.core_type<tc>, window_params = [{pipeline_mode = #tpu.pipeline_mode<synchronous>, transform_indices = @transform_0, window_bounds = array<i64: 16, 32>}, {pipeline_mode = #tpu.pipeline_mode<synchronous>, transform_indices = @transform_1, window_bounds = array<i64: 32, 384>}, {pipeline_mode = #tpu.pipeline_mode<synchronous>, transform_indices = @transform_2, window_bounds = array<i64: 64, 64>}, {pipeline_mode = #tpu.pipeline_mode<synchronous>, transform_indices = @transform_3, window_bounds = array<i64: 16, 128>}, {pipeline_mode = #tpu.pipeline_mode<synchronous>, transform_indices = @transform_4, window_bounds = array<i64: 16, 32>}]} {
    %c0 = arith.constant 0 : index
    %c0_0 = arith.constant 0 : index
    %0 = vector.load %arg4[%c0, %c0_0] : memref<16x128xf32, #tpu.memory_space<vmem>>, vector<1x32xf32>
    %c1 = arith.constant 1 : index
    %c0_1 = arith.constant 0 : index
    %1 = vector.load %arg4[%c1, %c0_1] : memref<16x128xf32, #tpu.memory_space<vmem>>, vector<1x32xf32>
    %c2 = arith.constant 2 : index
    %c0_2 = arith.constant 0 : index
    %2 = vector.load %arg4[%c2, %c0_2] : memref<16x128xf32, #tpu.memory_space<vmem>>, vector<1x64xf32>
    %c3 = arith.constant 3 : index
    %c0_3 = arith.constant 0 : index
    %3 = vector.load %arg4[%c3, %c0_3] : memref<16x128xf32, #tpu.memory_space<vmem>>, vector<1x96xf32>
    %c4 = arith.constant 4 : index
    %c0_4 = arith.constant 0 : index
    %4 = vector.load %arg4[%c4, %c0_4] : memref<16x128xf32, #tpu.memory_space<vmem>>, vector<1x4xf32>
    %c5 = arith.constant 5 : index
    %c0_5 = arith.constant 0 : index
    %5 = vector.load %arg4[%c5, %c0_5] : memref<16x128xf32, #tpu.memory_space<vmem>>, vector<1x4xf32>
    %c6 = arith.constant 6 : index
    %c0_6 = arith.constant 0 : index
    %6 = vector.load %arg4[%c6, %c0_6] : memref<16x128xf32, #tpu.memory_space<vmem>>, vector<1x64xf32>
    %c8 = arith.constant 8 : index
    %c0_7 = arith.constant 0 : index
    %7 = vector.load %arg4[%c8, %c0_7] : memref<16x128xf32, #tpu.memory_space<vmem>>, vector<4x96xf32>
    %c0_8 = arith.constant 0 : index
    %c96 = arith.constant 96 : index
    %8 = vector.load %arg4[%c0_8, %c96] : memref<16x128xf32, #tpu.memory_space<vmem>>, vector<16x4xf32>
    %c0_9 = arith.constant 0 : index
    %c112 = arith.constant 112 : index
    %9 = vector.load %arg4[%c0_9, %c112] : memref<16x128xf32, #tpu.memory_space<vmem>>, vector<16x16xf32>
    %c0_10 = arith.constant 0 : index
    %c0_11 = arith.constant 0 : index
    %10 = vector.load %arg1[%c0_10, %c0_11] : memref<16x32xf32, #tpu.memory_space<vmem>>, vector<16x32xf32>
    %11 = arith.mulf %10, %10 : vector<16x32xf32>
    %cst = arith.constant dense<0.000000e+00> : vector<16xf32>
    %12 = vector.multi_reduction <add>, %11, %cst [1] : vector<16x32xf32> to vector<16xf32>
    %13 = vector.shape_cast %12 : vector<16xf32> to vector<16x1xf32>
    %cst_12 = arith.constant 3.200000e+01 : f32
    %14 = vector.broadcast %cst_12 : f32 to vector<16x1xf32>
    %15 = arith.divf %13, %14 : vector<16x1xf32>
    %cst_13 = arith.constant 9.99999974E-6 : f32
    %16 = vector.broadcast %cst_13 : f32 to vector<16x1xf32>
    %17 = arith.addf %15, %16 : vector<16x1xf32>
    %18 = math.rsqrt %17 : vector<16x1xf32>
    %19 = vector.broadcast %18 : vector<16x1xf32> to vector<16x32xf32>
    %20 = arith.mulf %10, %19 : vector<16x32xf32>
    %21 = vector.broadcast %0 : vector<1x32xf32> to vector<16x32xf32>
    %22 = arith.mulf %20, %21 : vector<16x32xf32>
    %c0_14 = arith.constant 0 : index
    %c0_15 = arith.constant 0 : index
    %23 = vector.load %arg2[%c0_14, %c0_15] : memref<32x384xf32, #tpu.memory_space<vmem>>, vector<32x256xf32>
    %cst_16 = arith.constant dense<0.000000e+00> : vector<16x256xf32>
    %24 = tpu.matmul %22, %23, %cst_16 {dimension_numbers = #tpu.dot_dimension_numbers<[1], [0], [0], [1], [0, 0, 1, 1], [], []>} : vector<16x32xf32>, vector<32x256xf32>, vector<16x256xf32> -> vector<16x256xf32>
    %25 = vector.extract_strided_slice %24 {offsets = [0, 0], sizes = [16, 96], strides = [1, 1]} : vector<16x256xf32> to vector<16x96xf32>
    %26 = vector.extract_strided_slice %24 {offsets = [0, 128], sizes = [16, 64], strides = [1, 1]} : vector<16x256xf32> to vector<16x64xf32>
    %27 = vector.extract_strided_slice %24 {offsets = [0, 192], sizes = [16, 4], strides = [1, 1]} : vector<16x256xf32> to vector<16x4xf32>
    %cst_17 = arith.constant 0.000000e+00 : f32
    %28 = vector.broadcast %cst_17 : f32 to vector<8x96xf32>
    %29 = tpu.concatenate %28, %25 in 0 : vector<8x96xf32>, vector<16x96xf32> -> vector<24x96xf32>
    %cst_18 = arith.constant 0.000000e+00 : f32
    %30 = vector.broadcast %cst_18 : f32 to vector<16x96xf32>
    %31 = vector.broadcast %3 : vector<1x96xf32> to vector<16x96xf32>
    %32 = arith.addf %30, %31 : vector<16x96xf32>
    %33 = vector.extract_strided_slice %29 {offsets = [8, 0], sizes = [16, 96], strides = [1, 1]} : vector<24x96xf32> to vector<16x96xf32>
    %34 = vector.extract_strided_slice %8 {offsets = [0, 0], sizes = [16, 1], strides = [1, 1]} : vector<16x4xf32> to vector<16x1xf32>
    %35 = vector.broadcast %34 : vector<16x1xf32> to vector<16x96xf32>
    %36 = arith.mulf %33, %35 : vector<16x96xf32>
    %37 = vector.extract_strided_slice %7 {offsets = [3, 0], sizes = [1, 96], strides = [1, 1]} : vector<4x96xf32> to vector<1x96xf32>
    %38 = vector.broadcast %37 : vector<1x96xf32> to vector<16x96xf32>
    %39 = arith.mulf %36, %38 : vector<16x96xf32>
    %40 = arith.addf %32, %39 : vector<16x96xf32>
    %41 = vector.extract_strided_slice %29 {offsets = [7, 0], sizes = [16, 96], strides = [1, 1]} : vector<24x96xf32> to vector<16x96xf32>
    %42 = vector.extract_strided_slice %8 {offsets = [0, 1], sizes = [16, 1], strides = [1, 1]} : vector<16x4xf32> to vector<16x1xf32>
    %43 = vector.broadcast %42 : vector<16x1xf32> to vector<16x96xf32>
    %44 = arith.mulf %41, %43 : vector<16x96xf32>
    %45 = vector.extract_strided_slice %7 {offsets = [2, 0], sizes = [1, 96], strides = [1, 1]} : vector<4x96xf32> to vector<1x96xf32>
    %46 = vector.broadcast %45 : vector<1x96xf32> to vector<16x96xf32>
    %47 = arith.mulf %44, %46 : vector<16x96xf32>
    %48 = arith.addf %40, %47 : vector<16x96xf32>
    %49 = vector.extract_strided_slice %29 {offsets = [6, 0], sizes = [16, 96], strides = [1, 1]} : vector<24x96xf32> to vector<16x96xf32>
    %50 = vector.extract_strided_slice %8 {offsets = [0, 2], sizes = [16, 1], strides = [1, 1]} : vector<16x4xf32> to vector<16x1xf32>
    %51 = vector.broadcast %50 : vector<16x1xf32> to vector<16x96xf32>
    %52 = arith.mulf %49, %51 : vector<16x96xf32>
    %53 = vector.extract_strided_slice %7 {offsets = [1, 0], sizes = [1, 96], strides = [1, 1]} : vector<4x96xf32> to vector<1x96xf32>
    %54 = vector.broadcast %53 : vector<1x96xf32> to vector<16x96xf32>
    %55 = arith.mulf %52, %54 : vector<16x96xf32>
    %56 = arith.addf %48, %55 : vector<16x96xf32>
    %57 = vector.extract_strided_slice %29 {offsets = [5, 0], sizes = [16, 96], strides = [1, 1]} : vector<24x96xf32> to vector<16x96xf32>
    %58 = vector.extract_strided_slice %8 {offsets = [0, 3], sizes = [16, 1], strides = [1, 1]} : vector<16x4xf32> to vector<16x1xf32>
    %59 = vector.broadcast %58 : vector<16x1xf32> to vector<16x96xf32>
    %60 = arith.mulf %57, %59 : vector<16x96xf32>
    %61 = vector.extract_strided_slice %7 {offsets = [0, 0], sizes = [1, 96], strides = [1, 1]} : vector<4x96xf32> to vector<1x96xf32>
    %62 = vector.broadcast %61 : vector<1x96xf32> to vector<16x96xf32>
    %63 = arith.mulf %60, %62 : vector<16x96xf32>
    %64 = arith.addf %56, %63 : vector<16x96xf32>
    %cst_19 = arith.constant 0.000000e+00 : f32
    %65 = vector.broadcast %cst_19 : f32 to vector<16x96xf32>
    %66 = arith.subf %65, %64 : vector<16x96xf32>
    %67 = math.exp %66 : vector<16x96xf32>
    %cst_20 = arith.constant 1.000000e+00 : f32
    %68 = vector.broadcast %cst_20 : f32 to vector<16x96xf32>
    %69 = arith.addf %68, %67 : vector<16x96xf32>
    %cst_21 = arith.constant 1.000000e+00 : f32
    %70 = vector.broadcast %cst_21 : f32 to vector<16x96xf32>
    %71 = arith.divf %70, %69 : vector<16x96xf32>
    %72 = arith.mulf %64, %71 : vector<16x96xf32>
    %73 = vector.extract_strided_slice %72 {offsets = [0, 0], sizes = [16, 16], strides = [1, 1]} : vector<16x96xf32> to vector<16x16xf32>
    %74 = vector.extract_strided_slice %72 {offsets = [0, 16], sizes = [16, 16], strides = [1, 1]} : vector<16x96xf32> to vector<16x16xf32>
    %75 = vector.extract_strided_slice %72 {offsets = [0, 32], sizes = [16, 64], strides = [1, 1]} : vector<16x96xf32> to vector<16x64xf32>
    %76 = vector.broadcast %4 : vector<1x4xf32> to vector<16x4xf32>
    %77 = arith.addf %27, %76 : vector<16x4xf32>
    %cst_22 = arith.constant 0.000000e+00 : f32
    %78 = vector.broadcast %cst_22 : f32 to vector<16x4xf32>
    %79 = arith.maximumf %77, %78 : vector<16x4xf32>
    %80 = math.absf %77 : vector<16x4xf32>
    %cst_23 = arith.constant 0.000000e+00 : f32
    %81 = vector.broadcast %cst_23 : f32 to vector<16x4xf32>
    %82 = arith.subf %81, %80 : vector<16x4xf32>
    %83 = math.exp %82 : vector<16x4xf32>
    %84 = math.log1p %83 : vector<16x4xf32>
    %85 = arith.addf %79, %84 : vector<16x4xf32>
    %86 = vector.broadcast %5 : vector<1x4xf32> to vector<16x4xf32>
    %87 = arith.mulf %85, %86 : vector<16x4xf32>
    %cst_24 = arith.constant dense<0.000000e+00> : vector<16x4xf32>
    %88 = tpu.matmul %9, %87, %cst_24 {dimension_numbers = #tpu.dot_dimension_numbers<[1], [0], [0], [1], [0, 0, 1, 1], [], []>} : vector<16x16xf32>, vector<16x4xf32>, vector<16x4xf32> -> vector<16x4xf32>
    %89 = tpu.transpose %88, [1, 0] : vector<16x4xf32> -> vector<4x16xf32>
    %90 = vector.shape_cast %89 : vector<4x16xf32> to vector<4x16x1xf32>
    %91 = vector.shape_cast %89 : vector<4x16xf32> to vector<4x1x16xf32>
    %92 = vector.broadcast %90 : vector<4x16x1xf32> to vector<4x16x16xf32>
    %93 = vector.broadcast %91 : vector<4x1x16xf32> to vector<4x16x16xf32>
    %94 = arith.subf %92, %93 : vector<4x16x16xf32>
    %cst_25 = arith.constant 0.000000e+00 : f32
    %95 = vector.broadcast %cst_25 : f32 to vector<4x16x16xf32>
    %96 = arith.minimumf %94, %95 : vector<4x16x16xf32>
    %97 = math.exp %96 : vector<4x16x16xf32>
    %98 = vector.shape_cast %9 : vector<16x16xf32> to vector<1x16x16xf32>
    %99 = vector.broadcast %98 : vector<1x16x16xf32> to vector<4x16x16xf32>
    %100 = arith.mulf %97, %99 : vector<4x16x16xf32>
    %101 = vector.shape_cast %73 : vector<16x16xf32> to vector<1x16x16xf32>
    %102 = vector.shape_cast %73 : vector<16x16xf32> to vector<1x16x16xf32>
    %103 = vector.shape_cast %73 : vector<16x16xf32> to vector<1x16x16xf32>
    %104 = vector.shape_cast %73 : vector<16x16xf32> to vector<1x16x16xf32>
    %105 = tpu.concatenate %101, %102, %103, %104 in 0 : vector<1x16x16xf32>, vector<1x16x16xf32>, vector<1x16x16xf32>, vector<1x16x16xf32> -> vector<4x16x16xf32>
    %106 = vector.extract_strided_slice %85 {offsets = [0, 0], sizes = [16, 1], strides = [1, 1]} : vector<16x4xf32> to vector<16x1xf32>
    %107 = vector.broadcast %106 : vector<16x1xf32> to vector<16x16xf32>
    %108 = arith.mulf %74, %107 : vector<16x16xf32>
    %109 = vector.extract_strided_slice %85 {offsets = [0, 1], sizes = [16, 1], strides = [1, 1]} : vector<16x4xf32> to vector<16x1xf32>
    %110 = vector.broadcast %109 : vector<16x1xf32> to vector<16x16xf32>
    %111 = arith.mulf %74, %110 : vector<16x16xf32>
    %112 = vector.extract_strided_slice %85 {offsets = [0, 2], sizes = [16, 1], strides = [1, 1]} : vector<16x4xf32> to vector<16x1xf32>
    %113 = vector.broadcast %112 : vector<16x1xf32> to vector<16x16xf32>
    %114 = arith.mulf %74, %113 : vector<16x16xf32>
    %115 = vector.extract_strided_slice %85 {offsets = [0, 3], sizes = [16, 1], strides = [1, 1]} : vector<16x4xf32> to vector<16x1xf32>
    %116 = vector.broadcast %115 : vector<16x1xf32> to vector<16x16xf32>
    %117 = arith.mulf %74, %116 : vector<16x16xf32>
    %118 = vector.shape_cast %108 : vector<16x16xf32> to vector<1x16x16xf32>
    %119 = vector.shape_cast %111 : vector<16x16xf32> to vector<1x16x16xf32>
    %120 = vector.shape_cast %114 : vector<16x16xf32> to vector<1x16x16xf32>
    %121 = vector.shape_cast %117 : vector<16x16xf32> to vector<1x16x16xf32>
    %122 = tpu.concatenate %118, %119, %120, %121 in 0 : vector<1x16x16xf32>, vector<1x16x16xf32>, vector<1x16x16xf32>, vector<1x16x16xf32> -> vector<4x16x16xf32>
    %123 = vector.extract_strided_slice %75 {offsets = [0, 0], sizes = [16, 16], strides = [1, 1]} : vector<16x64xf32> to vector<16x16xf32>
    %124 = vector.extract_strided_slice %75 {offsets = [0, 16], sizes = [16, 16], strides = [1, 1]} : vector<16x64xf32> to vector<16x16xf32>
    %125 = vector.extract_strided_slice %75 {offsets = [0, 32], sizes = [16, 16], strides = [1, 1]} : vector<16x64xf32> to vector<16x16xf32>
    %126 = vector.extract_strided_slice %75 {offsets = [0, 48], sizes = [16, 16], strides = [1, 1]} : vector<16x64xf32> to vector<16x16xf32>
    %127 = vector.shape_cast %123 : vector<16x16xf32> to vector<1x16x16xf32>
    %128 = vector.shape_cast %124 : vector<16x16xf32> to vector<1x16x16xf32>
    %129 = vector.shape_cast %125 : vector<16x16xf32> to vector<1x16x16xf32>
    %130 = vector.shape_cast %126 : vector<16x16xf32> to vector<1x16x16xf32>
    %131 = tpu.concatenate %127, %128, %129, %130 in 0 : vector<1x16x16xf32>, vector<1x16x16xf32>, vector<1x16x16xf32>, vector<1x16x16xf32> -> vector<4x16x16xf32>
    "tpu.trace_start"() <{level = 10 : i32, message = "htd,hsd->hts"}> : () -> ()
    %cst_26 = arith.constant dense<0.000000e+00> : vector<4x16x16xf32>
    %132 = tpu.matmul %131, %122, %cst_26 {dimension_numbers = #tpu.dot_dimension_numbers<[2], [2], [1], [1], [0, 0, 0, 1, 1, 1], [0], [0]>} : vector<4x16x16xf32>, vector<4x16x16xf32>, vector<4x16x16xf32> -> vector<4x16x16xf32>
    "tpu.trace_stop"() : () -> ()
    %133 = arith.mulf %100, %132 : vector<4x16x16xf32>
    "tpu.trace_start"() <{level = 10 : i32, message = "hts,hsp->htp"}> : () -> ()
    %cst_27 = arith.constant dense<0.000000e+00> : vector<4x16x16xf32>
    %134 = tpu.matmul %133, %105, %cst_27 {dimension_numbers = #tpu.dot_dimension_numbers<[2], [1], [1], [2], [0, 0, 0, 1, 1, 2], [0], [0]>} : vector<4x16x16xf32>, vector<4x16x16xf32>, vector<4x16x16xf32> -> vector<4x16x16xf32>
    "tpu.trace_stop"() : () -> ()
    %135 = vector.extract_strided_slice %134 {offsets = [0, 0, 0], sizes = [1, 16, 16], strides = [1, 1, 1]} : vector<4x16x16xf32> to vector<1x16x16xf32>
    %136 = vector.shape_cast %135 : vector<1x16x16xf32> to vector<16x16xf32>
    %137 = vector.extract_strided_slice %134 {offsets = [1, 0, 0], sizes = [1, 16, 16], strides = [1, 1, 1]} : vector<4x16x16xf32> to vector<1x16x16xf32>
    %138 = vector.shape_cast %137 : vector<1x16x16xf32> to vector<16x16xf32>
    %139 = vector.extract_strided_slice %134 {offsets = [2, 0, 0], sizes = [1, 16, 16], strides = [1, 1, 1]} : vector<4x16x16xf32> to vector<1x16x16xf32>
    %140 = vector.shape_cast %139 : vector<1x16x16xf32> to vector<16x16xf32>
    %141 = vector.extract_strided_slice %134 {offsets = [3, 0, 0], sizes = [1, 16, 16], strides = [1, 1, 1]} : vector<4x16x16xf32> to vector<1x16x16xf32>
    %142 = vector.shape_cast %141 : vector<1x16x16xf32> to vector<16x16xf32>
    %143 = tpu.concatenate %136, %138, %140, %142 in 1 : vector<16x16xf32>, vector<16x16xf32>, vector<16x16xf32>, vector<16x16xf32> -> vector<16x64xf32>
    %144 = tpu.concatenate %73, %73, %73, %73 in 1 : vector<16x16xf32>, vector<16x16xf32>, vector<16x16xf32>, vector<16x16xf32> -> vector<16x64xf32>
    %145 = vector.broadcast %6 : vector<1x64xf32> to vector<16x64xf32>
    %146 = arith.mulf %144, %145 : vector<16x64xf32>
    %147 = arith.addf %143, %146 : vector<16x64xf32>
    %cst_28 = arith.constant 0.000000e+00 : f32
    %148 = vector.broadcast %cst_28 : f32 to vector<16x64xf32>
    %149 = arith.subf %148, %26 : vector<16x64xf32>
    %150 = math.exp %149 : vector<16x64xf32>
    %cst_29 = arith.constant 1.000000e+00 : f32
    %151 = vector.broadcast %cst_29 : f32 to vector<16x64xf32>
    %152 = arith.addf %151, %150 : vector<16x64xf32>
    %cst_30 = arith.constant 1.000000e+00 : f32
    %153 = vector.broadcast %cst_30 : f32 to vector<16x64xf32>
    %154 = arith.divf %153, %152 : vector<16x64xf32>
    %155 = arith.mulf %26, %154 : vector<16x64xf32>
    %156 = arith.mulf %147, %155 : vector<16x64xf32>
    %157 = arith.mulf %156, %156 : vector<16x64xf32>
    %cst_31 = arith.constant dense<0.000000e+00> : vector<16xf32>
    %158 = vector.multi_reduction <add>, %157, %cst_31 [1] : vector<16x64xf32> to vector<16xf32>
    %159 = vector.shape_cast %158 : vector<16xf32> to vector<16x1xf32>
    %cst_32 = arith.constant 6.400000e+01 : f32
    %160 = vector.broadcast %cst_32 : f32 to vector<16x1xf32>
    %161 = arith.divf %159, %160 : vector<16x1xf32>
    %cst_33 = arith.constant 9.99999974E-6 : f32
    %162 = vector.broadcast %cst_33 : f32 to vector<16x1xf32>
    %163 = arith.addf %161, %162 : vector<16x1xf32>
    %164 = math.rsqrt %163 : vector<16x1xf32>
    %165 = vector.broadcast %164 : vector<16x1xf32> to vector<16x64xf32>
    %166 = arith.mulf %156, %165 : vector<16x64xf32>
    %167 = vector.broadcast %2 : vector<1x64xf32> to vector<16x64xf32>
    %168 = arith.mulf %166, %167 : vector<16x64xf32>
    %c0_34 = arith.constant 0 : index
    %c0_35 = arith.constant 0 : index
    %169 = vector.load %arg3[%c0_34, %c0_35] : memref<64x64xf32, #tpu.memory_space<vmem>>, vector<64x32xf32>
    %cst_36 = arith.constant dense<0.000000e+00> : vector<16x32xf32>
    %170 = tpu.matmul %168, %169, %cst_36 {dimension_numbers = #tpu.dot_dimension_numbers<[1], [0], [0], [1], [0, 0, 1, 1], [], []>} : vector<16x64xf32>, vector<64x32xf32>, vector<16x32xf32> -> vector<16x32xf32>
    %171 = arith.addf %10, %170 : vector<16x32xf32>
    %172 = arith.mulf %171, %171 : vector<16x32xf32>
    %cst_37 = arith.constant dense<0.000000e+00> : vector<16xf32>
    %173 = vector.multi_reduction <add>, %172, %cst_37 [1] : vector<16x32xf32> to vector<16xf32>
    %174 = vector.shape_cast %173 : vector<16xf32> to vector<16x1xf32>
    %cst_38 = arith.constant 3.200000e+01 : f32
    %175 = vector.broadcast %cst_38 : f32 to vector<16x1xf32>
    %176 = arith.divf %174, %175 : vector<16x1xf32>
    %cst_39 = arith.constant 9.99999974E-6 : f32
    %177 = vector.broadcast %cst_39 : f32 to vector<16x1xf32>
    %178 = arith.addf %176, %177 : vector<16x1xf32>
    %179 = math.rsqrt %178 : vector<16x1xf32>
    %180 = vector.broadcast %179 : vector<16x1xf32> to vector<16x32xf32>
    %181 = arith.mulf %171, %180 : vector<16x32xf32>
    %182 = vector.broadcast %1 : vector<1x32xf32> to vector<16x32xf32>
    %183 = arith.mulf %181, %182 : vector<16x32xf32>
    %c0_40 = arith.constant 0 : index
    %c256 = arith.constant 256 : index
    %184 = vector.load %arg2[%c0_40, %c256] : memref<32x384xf32, #tpu.memory_space<vmem>>, vector<32x128xf32>
    %cst_41 = arith.constant dense<0.000000e+00> : vector<16x128xf32>
    %185 = tpu.matmul %183, %184, %cst_41 {dimension_numbers = #tpu.dot_dimension_numbers<[1], [0], [0], [1], [0, 0, 1, 1], [], []>} : vector<16x32xf32>, vector<32x128xf32>, vector<16x128xf32> -> vector<16x128xf32>
    %186 = vector.extract_strided_slice %185 {offsets = [0, 0], sizes = [16, 64], strides = [1, 1]} : vector<16x128xf32> to vector<16x64xf32>
    %cst_42 = arith.constant 0.000000e+00 : f32
    %187 = vector.broadcast %cst_42 : f32 to vector<16x64xf32>
    %188 = arith.subf %187, %186 : vector<16x64xf32>
    %189 = math.exp %188 : vector<16x64xf32>
    %cst_43 = arith.constant 1.000000e+00 : f32
    %190 = vector.broadcast %cst_43 : f32 to vector<16x64xf32>
    %191 = arith.addf %190, %189 : vector<16x64xf32>
    %cst_44 = arith.constant 1.000000e+00 : f32
    %192 = vector.broadcast %cst_44 : f32 to vector<16x64xf32>
    %193 = arith.divf %192, %191 : vector<16x64xf32>
    %194 = arith.mulf %186, %193 : vector<16x64xf32>
    %195 = vector.extract_strided_slice %185 {offsets = [0, 64], sizes = [16, 64], strides = [1, 1]} : vector<16x128xf32> to vector<16x64xf32>
    %196 = arith.mulf %194, %195 : vector<16x64xf32>
    %c0_45 = arith.constant 0 : index
    %c32 = arith.constant 32 : index
    %197 = vector.load %arg3[%c0_45, %c32] : memref<64x64xf32, #tpu.memory_space<vmem>>, vector<64x32xf32>
    %cst_46 = arith.constant dense<0.000000e+00> : vector<16x32xf32>
    %198 = tpu.matmul %196, %197, %cst_46 {dimension_numbers = #tpu.dot_dimension_numbers<[1], [0], [0], [1], [0, 0, 1, 1], [], []>} : vector<16x64xf32>, vector<64x32xf32>, vector<16x32xf32> -> vector<16x32xf32>
    %199 = arith.addf %171, %198 : vector<16x32xf32>
    %c0_47 = arith.constant 0 : index
    %c0_48 = arith.constant 0 : index
    %200 = vector.load %arg5[%c0_47, %c0_48] : memref<16x32xf32, #tpu.memory_space<vmem>>, vector<16x32xf32>
    tpu.vector_store %arg5[%c0_47, %c0_48], %199 {strides = array<i32>} : memref<16x32xf32, #tpu.memory_space<vmem>>, vector<16x32xf32>,
    return
  }
  func.func @transform_0(%arg0: i32) -> (i32, i32) {
    %c0_i32 = arith.constant 0 : i32
    %c0_i32_0 = arith.constant 0 : i32
    %c0_i32_1 = arith.constant 0 : i32
    return %c0_i32, %c0_i32_0 : i32, i32
  }
  func.func @transform_1(%arg0: i32) -> (i32, i32) {
    %c0_i32 = arith.constant 0 : i32
    %c0_i32_0 = arith.constant 0 : i32
    %c0_i32_1 = arith.constant 0 : i32
    return %c0_i32, %c0_i32_0 : i32, i32
  }
  func.func @transform_2(%arg0: i32) -> (i32, i32) {
    %c0_i32 = arith.constant 0 : i32
    %c0_i32_0 = arith.constant 0 : i32
    %c0_i32_1 = arith.constant 0 : i32
    return %c0_i32, %c0_i32_0 : i32, i32
  }
  func.func @transform_3(%arg0: i32) -> (i32, i32) {
    %c0_i32 = arith.constant 0 : i32
    %c0_i32_0 = arith.constant 0 : i32
    %c0_i32_1 = arith.constant 0 : i32
    return %c0_i32, %c0_i32_0 : i32, i32
  }
  func.func @transform_4(%arg0: i32) -> (i32, i32) {
    %c0_i32 = arith.constant 0 : i32
    %c0_i32_0 = arith.constant 0 : i32
    %c0_i32_1 = arith.constant 0 : i32
    return %c0_i32, %c0_i32_0 : i32, i32
  }
}

</mosaic_0001>

<llo_original>
// kernel: tpu_custom_call.1
$region0: #{tpu_custom_call.1}
  #allocation0 [shape = 'u32[]', space=smem, size = 0x4, offset = 0x4, fixed_abs, tag = 'smem constant byte address 0x4 - core index']
  #allocation1 [shape = 'u32[144,128]{1,0:T(1,128)}', space=vmem, size = 0x12000, scoped, tag = 'internal scratch']
  %s0 = inlined_call_operand.hbm [shape: f32[16,32], index: 0, kind: input, shape index: {}]
  %s1 = inlined_call_operand.hbm [shape: f32[32,384], index: 1, kind: input, shape index: {}]
  %s2 = inlined_call_operand.hbm [shape: f32[64,64], index: 2, kind: input, shape index: {}]
  %s3 = inlined_call_operand.hbm [shape: f32[16,128], index: 3, kind: input, shape index: {}]
  %s4 = inlined_call_operand.hbm [shape: f32[16,32], index: 4, kind: output, shape index: {}]
  %s5 = sld [smem:[#allocation0]]
  $region42: #{tpu_custom_call.1} parent=0
    _
  %s7 = ssub.s32 1, %s5
  %s8 = scalar_select 0, %s7, %s5
  $region1: #{tpu_custom_call.1} parent=0
    #allocation2 [shape = 'u8[8192]{0}', space=vmem, size = 0x2000, scoped, tag = 'input window, operand 0, single buffered']
    #allocation3 [shape = 's32[1]{0}', space=sflag, size = 0x4, scoped, tag = 'scoped memory for tpu_custom_call.1']
    #allocation4 [shape = 's32[1]{0}', space=sflag, size = 0x4, scoped, tag = 'scoped memory for tpu_custom_call.1']
    #allocation5 [shape = 'u8[49152]{0}', space=vmem, size = 0xc000, scoped, tag = 'input window, operand 1, single buffered']
    #allocation6 [shape = 's32[1]{0}', space=sflag, size = 0x4, scoped, tag = 'scoped memory for tpu_custom_call.1']
    #allocation7 [shape = 'u8[32768]{0}', space=vmem, size = 0x8000, scoped, tag = 'input window, operand 2, single buffered']
    #allocation8 [shape = 'u8[8192]{0}', space=vmem, size = 0x2000, scoped, tag = 'input window, operand 3, single buffered']
    #allocation9 [shape = 's32[1]{0}', space=sflag, size = 0x4, scoped, tag = 'scoped memory for tpu_custom_call.1']
    #allocation10 [shape = 'u8[8192]{0}', space=vmem, size = 0x2000, scoped, tag = 'output window, operand 0, single buffered']
    %9 = vsyncpa [#allocation3], 0
    %10 = vsyncpa [#allocation6], 0
    %11 = vsyncpa [#allocation9], 0
    %12 = vsyncpa [#allocation4], 0
    // Predicated region
    $region2: #{tpu_custom_call.1} parent=1 // pred_check
      _
    $region3: #{tpu_custom_call.1} parent=1 // pred_check_branch
      %14 = sbr.rel (0) target = $region5
    $region4: #{tpu_custom_call.1} parent=1 // pred_region
      %s16 = ssub.s32 256, 256
      %17 = vsyncadd [#allocation3], %s16
      %s18 = sshll.u32 [#allocation2], 4
      %s19 = int_to_ptr.vmem [resolvable:$true] %s18
      %24 = dma.hbm_to_vmem [thread:$0]  %s0, 256, %s19, [#allocation3], 128, 128, 8
    $region5: #{tpu_custom_call.1} parent=1 // pred_fallthru
      _
    // Predicated region
    $region6: #{tpu_custom_call.1} parent=1 // pred_check
      _
    $region7: #{tpu_custom_call.1} parent=1 // pred_check_branch
      %26 = sbr.rel (0) target = $region9
    $region8: #{tpu_custom_call.1} parent=1 // pred_region
      %s28 = ssub.s32 1536, 1536
      %29 = vsyncadd [#allocation6], %s28
      %s30 = sshll.u32 [#allocation5], 4
      %s31 = int_to_ptr.vmem [resolvable:$true] %s30
      %36 = dma.hbm_to_vmem [thread:$0]  %s1, 1536, %s31, [#allocation6], 384, 384, 24
    $region9: #{tpu_custom_call.1} parent=1 // pred_fallthru
      _
    // Predicated region
    $region10: #{tpu_custom_call.1} parent=1 // pred_check
      _
    $region11: #{tpu_custom_call.1} parent=1 // pred_check_branch
      %38 = sbr.rel (0) target = $region13
    $region12: #{tpu_custom_call.1} parent=1 // pred_region
      %s40 = ssub.s32 1024, 1024
      %41 = vsyncadd [#allocation6], %s40
      %s42 = sshll.u32 [#allocation7], 4
      %s43 = int_to_ptr.vmem [resolvable:$true] %s42
      %48 = dma.hbm_to_vmem [thread:$0]  %s2, 1024, %s43, [#allocation6], 128, 128, 8
    $region13: #{tpu_custom_call.1} parent=1 // pred_fallthru
      _
    // Predicated region
    $region14: #{tpu_custom_call.1} parent=1 // pred_check
      _
    $region15: #{tpu_custom_call.1} parent=1 // pred_check_branch
      %50 = sbr.rel (0) target = $region17
    $region16: #{tpu_custom_call.1} parent=1 // pred_region
      %s52 = ssub.s32 256, 256
      %53 = vsyncadd [#allocation9], %s52
      %s54 = sshll.u32 [#allocation8], 4
      %s55 = int_to_ptr.vmem [resolvable:$true] %s54
      %60 = dma.hbm_to_vmem [thread:$0]  %s3, 256, %s55, [#allocation9], 128, 128, 8
    $region17: #{tpu_custom_call.1} parent=1 // pred_fallthru
      _
    // Predicated region
    $region18: #{tpu_custom_call.1} parent=1 // pred_check
      _
    $region19: #{tpu_custom_call.1} parent=1 // pred_check_branch
      %62 = sbr.rel (0) target = $region21
    $region20: #{tpu_custom_call.1} parent=1 // pred_region
      %63 = dma.done [#allocation3], 256
    $region21: #{tpu_custom_call.1} parent=1 // pred_fallthru
      _
    // Predicated region
    $region22: #{tpu_custom_call.1} parent=1 // pred_check
      _
    $region23: #{tpu_custom_call.1} parent=1 // pred_check_branch
      %65 = sbr.rel (0) target = $region25
    $region24: #{tpu_custom_call.1} parent=1 // pred_region
      %66 = dma.done [#allocation6], 1536
    $region25: #{tpu_custom_call.1} parent=1 // pred_fallthru
      _
    // Predicated region
    $region26: #{tpu_custom_call.1} parent=1 // pred_check
      _
    $region27: #{tpu_custom_call.1} parent=1 // pred_check_branch
      %68 = sbr.rel (0) target = $region29
    $region28: #{tpu_custom_call.1} parent=1 // pred_region
      %69 = dma.done [#allocation6], 1024
    $region29: #{tpu_custom_call.1} parent=1 // pred_fallthru
      _
    // Predicated region
    $region30: #{tpu_custom_call.1} parent=1 // pred_check
      _
    $region31: #{tpu_custom_call.1} parent=1 // pred_check_branch
      %71 = sbr.rel (0) target = $region33
    $region32: #{tpu_custom_call.1} parent=1 // pred_region
      %72 = dma.done [#allocation9], 256
    $region33: #{tpu_custom_call.1} parent=1 // pred_fallthru
      _
    %v73 = vld [vmem:[#allocation8] sm:$0x1]
    %v74 = vld [vmem:[#allocation8 + $0x1] sm:$0x1]
    %v75 = vld [vmem:[#allocation8 + $0x2] sm:$0x1]
    %v76 = vld [vmem:[#allocation8 + $0x3] sm:$0x1]
    %v77 = vld [vmem:[#allocation8 + $0x4] sm:$0x1]
    %v78 = vld [vmem:[#allocation8 + $0x5] sm:$0x1]
    %v79 = vld [vmem:[#allocation8 + $0x6] sm:$0x1]
    %v80 = vld [vmem:[#allocation8 + $0x8] sm:$0xf]
    %v81 = vld [vmem:[#allocation8] sm:$0xff]
    %v82 = vld [vmem:[#allocation8 + $0x8] sm:$0xff]
    %v83 = vld [vmem:[#allocation2] sm:$0xff]
    %v84 = vld [vmem:[#allocation2 + $0x8] sm:$0xff]
    %v85 = vmul.f32 %v83, %v83
    %v86 = vmul.f32 %v84, %v84
    %vm87 = vcmask 261120
    %v88 = vsel %vm87, %v85, 0.0
    %89 = vadd.xlane.f32.xlu0 %v88
    %v90 = vpop.xlane.xlu0 %89
    %v91 = vsel %vm87, %v86, 0.0
    %92 = vadd.xlane.f32.xlu0 %v91
    %v93 = vpop.xlane.xlu0 %92
    %v94 = vrcp.pop 32.0
    %v95 = vmul.f32 %v90, %v94
    %v96 = vmul.f32 %v93, %v94
    %v97 = vadd.f32 %v95, 1e-05
    %v98 = vadd.f32 %v96, 1e-05
    %v99 = vrsqrt.pop %v97
    %v100 = vrsqrt.pop %v98
    %v101 = vmul.f32 %v83, %v99
    %v102 = vmul.f32 %v84, %v100
    %v103 = vlaneseq
    %v104 = vshrl.u32 %v103, 7
    %v105 = vsub.s32 0, %v104
    %v106 = vrot.slane %v73, %v105
    %v107 = vmul.f32 %v101, %v106
    %v108 = vmul.f32 %v102, %v106
    %v109 = vld [vmem:[#allocation5] sm:$0xff]
    %v110 = vld [vmem:[#allocation5 + $0x8] sm:$0xff]
    %v111 = vld [vmem:[#allocation5 + $0x18] sm:$0xff]
    %v112 = vld [vmem:[#allocation5 + $0x20] sm:$0xff]
    %v113 = vld [vmem:[#allocation5 + $0x30] sm:$0xff]
    %v114 = vld [vmem:[#allocation5 + $0x38] sm:$0xff]
    %v115 = vld [vmem:[#allocation5 + $0x48] sm:$0xff]
    %v116 = vld [vmem:[#allocation5 + $0x50] sm:$0xff]
    %v118 = vsel %vm87, %v107, 0
    %v121 = vsel %vm87, %v108, 0
    %123 = vmatprep.subr.mxu0 %v110
    %124 = vmatpush1.msra.mxu0 %v109
    %125 = vmatprep.subr.mxu0 %v112
    %126 = vmatpush1.msra.mxu0 %v111
    %127 = vmatprep.subr.mxu0 %v114
    %128 = vmatpush1.msra.mxu0 %v113
    %129 = vmatprep.subr.mxu0 %v116
    %130 = vmatpush1.msra.mxu0 %v115
    %131 = vmatprep.subr.mxu0 0.0
    %132 = vmatpush1.msra.mxu0 0.0
    %133 = vmatprep.subr.mxu0 0.0
    %134 = vmatpush1.msra.mxu0 0.0
    %135 = vmatprep.subr.mxu0 0.0
    %136 = vmatpush1.msra.mxu0 0.0
    %137 = vmatprep.subr.mxu0 0.0
    %138 = vmatpush1.msra.mxu0 0.0
    %139 = vmatprep.subr.mxu0 0.0
    %140 = vmatpush1.msra.mxu0 0.0
    %141 = vmatprep.subr.mxu0 0.0
    %142 = vmatpush1.msra.mxu0 0.0
    %143 = vmatprep.subr.mxu0 0.0
    %144 = vmatpush1.msra.mxu0 0.0
    %145 = vmatprep.subr.mxu0 0.0
    %146 = vmatpush1.msra.mxu0 0.0
    %147 = vmatprep.subr.mxu0 0.0
    %148 = vmatpush1.msra.mxu0 0.0
    %149 = vmatprep.subr.mxu0 0.0
    %150 = vmatpush1.msra.mxu0 0.0
    %151 = vmatprep.subr.mxu0 0.0
    %152 = vmatpush1.msra.mxu0 0.0
    %153 = vmatprep.subr.mxu0 0.0
    %154 = vmatpush1.msra.mxu0 0.0
    %155 = vmatprep.subr.mxu0 0.0
    %156 = vmatpush1.msra.mxu0 0.0
    %157 = vmatprep.subr.mxu0 0.0
    %158 = vmatpush1.msra.mxu0 0.0
    %159 = vmatprep.subr.mxu0 0.0
    %160 = vmatpush1.msra.mxu0 0.0
    %161 = vmatprep.subr.mxu0 0.0
    %162 = vmatpush1.msra.mxu0 0.0
    %163 = vmatprep.subr.mxu0 0.0
    %164 = vmatpush1.msra.mxu0 0.0
    %165 = vmatprep.subr.mxu0 0.0
    %166 = vmatpush1.msra.mxu0 0.0
    %167 = vmatprep.subr.mxu0 0.0
    %168 = vmatpush1.msra.mxu0 0.0
    %169 = vmatprep.subr.mxu0 0.0
    %170 = vmatpush1.msra.mxu0 0.0
    %171 = vmatprep.subr.mxu0 0.0
    %172 = vmatpush1.msra.mxu0 0.0
    %173 = vmatprep.subr.mxu0 0.0
    %174 = vmatpush1.msra.mxu0 0.0
    %175 = vmatprep.subr.mxu0 0.0
    %176 = vmatpush1.msra.mxu0 0.0
    %177 = vmatprep.subr.mxu0 0.0
    %178 = vmatpush1.msra.mxu0 0.0
    %179 = vmatprep.subr.mxu0 0.0
    %180 = vmatpush1.msra.mxu0 0.0
    %181 = vmatprep.subr.mxu0 0.0
    %182 = vmatpush1.msra.mxu0 0.0
    %183 = vmatprep.subr.mxu0 0.0
    %184 = vmatpush1.msra.mxu0 0.0
    %185 = vmatprep.subr.mxu0 0.0
    %186 = vmatpush1.msra.mxu0 0.0
    %187 = vmatprep.mubr.f32.mxu0 0.0
    %188 = vmatmul.mubr.f32.gmra.mrb[0].mxu0 %v118
    %v189 = vpop.f32.mrb[0].mxu0
    %v190 = vadd.f32 0.0, %v189
    %v191 = vpop.f32.mrb[0].mxu0
    %v192 = vadd.f32 0.0, %v191
    %193 = vmatprep.mubr.f32.mxu0 0.0
    %194 = vmatmul.mubr.f32.gmra.mrb[0].mxu0 %v121
    %v195 = vpop.f32.mrb[0].mxu0
    %v196 = vadd.f32 0.0, %v195
    %v197 = vpop.f32.mrb[0].mxu0
    %v198 = vadd.f32 0.0, %v197
    %199 = vdwg.mxu0
    %v200 = vlaneseq
    %v201 = vshrl.u32 %v200, 7
    %v202 = vsub.s32 0, %v201
    %v203 = vrot.slane %v76, %v202
    %v204 = vadd.f32 %v203, 0.0
    %206 = vset.pattern.permute.xlu0 96
    %207 = vperm.xlu0 %206, %v81
    %v208 = vpop.permute.xlu0 %207
    %211 = vset.pattern.permute.xlu0 96
    %212 = vperm.xlu0 %211, %v82
    %v213 = vpop.permute.xlu0 %212
    %v215 = vmul.f32 %v190, %v208
    %v216 = vmul.f32 %v196, %v213
    %v217 = vlaneseq
    %v218 = vshrl.u32 %v217, 7
    %v219 = vsub.s32 3, %v218
    %v220 = vrot.slane %v80, %v219
    %v221 = vmul.f32 %v215, %v220
    %v222 = vmul.f32 %v216, %v220
    %v223 = vadd.f32 %v204, %v221
    %v224 = vadd.f32 %v204, %v222
    %225 = vset.pattern.permute.xlu0 97
    %226 = vperm.xlu0 %225, %v81
    %v227 = vpop.permute.xlu0 %226
    %228 = vset.pattern.permute.xlu0 97
    %229 = vperm.xlu0 %228, %v82
    %v230 = vpop.permute.xlu0 %229
    %vm231 = vcmask 1046528
    %v232 = vrot.slane %v227, 1
    %v233 = vrot.slane %v230, 1
    %v234 = vsel %vm231, %v232, %v233
    %v238 = vmul.f32 %v232, 0.0
    %v239 = vmul.f32 %v190, %v234
    %v240 = vmul.f32 %v196, %v233
    %v241 = vlaneseq
    %v242 = vshrl.u32 %v241, 7
    %v243 = vsub.s32 2, %v242
    %v244 = vrot.slane %v80, %v243
    %v245 = vmul.f32 %v238, %v244
    %v246 = vmul.f32 %v239, %v244
    %v247 = vmul.f32 %v240, %v244
    %vm251 = vcmask 1040384
    %v252 = vrot.slane %v245, 7
    %v253 = vrot.slane %v246, 7
    %v254 = vsel %vm251, %v252, %v253
    %v255 = vrot.slane %v247, 7
    %v256 = vsel %vm251, %v253, %v255
    %v259 = vadd.f32 %v223, %v254
    %v260 = vadd.f32 %v224, %v256
    %261 = vset.pattern.permute.xlu0 98
    %262 = vperm.xlu0 %261, %v81
    %v263 = vpop.permute.xlu0 %262
    %264 = vset.pattern.permute.xlu0 98
    %265 = vperm.xlu0 %264, %v82
    %v266 = vpop.permute.xlu0 %265
    %vm267 = vcmask 1045504
    %v268 = vrot.slane %v263, 2
    %v269 = vrot.slane %v266, 2
    %v270 = vsel %vm267, %v268, %v269
    %v274 = vmul.f32 %v268, 0.0
    %v275 = vmul.f32 %v190, %v270
    %v276 = vmul.f32 %v196, %v269
    %v277 = vlaneseq
    %v278 = vshrl.u32 %v277, 7
    %v279 = vsub.s32 1, %v278
    %v280 = vrot.slane %v80, %v279
    %v281 = vmul.f32 %v274, %v280
    %v282 = vmul.f32 %v275, %v280
    %v283 = vmul.f32 %v276, %v280
    %vm287 = vcmask 1041408
    %v288 = vrot.slane %v281, 6
    %v289 = vrot.slane %v282, 6
    %v290 = vsel %vm287, %v288, %v289
    %v291 = vrot.slane %v283, 6
    %v292 = vsel %vm287, %v289, %v291
    %v295 = vadd.f32 %v259, %v290
    %v296 = vadd.f32 %v260, %v292
    %297 = vset.pattern.permute.xlu0 99
    %298 = vperm.xlu0 %297, %v81
    %v299 = vpop.permute.xlu0 %298
    %300 = vset.pattern.permute.xlu0 99
    %301 = vperm.xlu0 %300, %v82
    %v302 = vpop.permute.xlu0 %301
    %vm303 = vcmask 1044480
    %v304 = vrot.slane %v299, 3
    %v305 = vrot.slane %v302, 3
    %v306 = vsel %vm303, %v304, %v305
    %v310 = vmul.f32 %v304, 0.0
    %v311 = vmul.f32 %v190, %v306
    %v312 = vmul.f32 %v196, %v305
    %v313 = vlaneseq
    %v314 = vshrl.u32 %v313, 7
    %v315 = vsub.s32 0, %v314
    %v316 = vrot.slane %v80, %v315
    %v317 = vmul.f32 %v310, %v316
    %v318 = vmul.f32 %v311, %v316
    %v319 = vmul.f32 %v312, %v316
    %vm323 = vcmask 1042432
    %v324 = vrot.slane %v317, 5
    %v325 = vrot.slane %v318, 5
    %v326 = vsel %vm323, %v324, %v325
    %v327 = vrot.slane %v319, 5
    %v328 = vsel %vm323, %v325, %v327
    %v331 = vadd.f32 %v295, %v326
    %v332 = vadd.f32 %v296, %v328
    %v333 = vsub.f32 0.0, %v331
    %v334 = vsub.f32 0.0, %v332
    %v335 = vmul.f32 %v333, 1.442695
    %v336 = vpow.pop %v335
    %v337 = vmul.f32 %v334, 1.442695
    %v338 = vpow.pop %v337
    %v339 = vadd.f32 %v336, 1.0
    %v340 = vadd.f32 %v338, 1.0
    %v341 = vrcp.pop %v339
    %v342 = vmul.f32 1.0, %v341
    %v343 = vrcp.pop %v340
    %v344 = vmul.f32 1.0, %v343
    %v345 = vmul.f32 %v331, %v342
    %v346 = vmul.f32 %v332, %v344
    %v347 = vlaneseq
    %v348 = vshrl.u32 %v347, 7
    %v349 = vsub.s32 0, %v348
    %v350 = vrot.slane %v77, %v349
    %352 = vrot.lane.b32.xlu0 %v350, 64
    %v353 = vpop.permute.xlu0 %352
    %v355 = vadd.f32 %v192, %v353
    %v356 = vadd.f32 %v198, %v353
    %v357 = vmax.f32 %v355, 0.0
    %v358 = vmax.f32 %v356, 0.0
    %v359 = vand.u32 2147483647, %v355
    %v360 = vand.u32 2147483647, %v356
    %v361 = vsub.f32 0.0, %v359
    %v362 = vsub.f32 0.0, %v360
    %v363 = vmul.f32 %v361, 1.442695
    %v364 = vpow.pop %v363
    %v365 = vmul.f32 %v362, 1.442695
    %v366 = vpow.pop %v365
    %v367 = vadd.f32 %v364, 1.0
    %v368 = vlog2.pop %v367
    %v369 = vmul.f32 %v368, 0.6931472
    %v370 = vmul.f32 -0.5, %v364
    %v371 = vadd.f32 %v370, 1.0
    %v372 = vmul.f32 %v371, %v364
    %v373 = vand.u32 2147483647, %v364
    %vm374 = vcmp.lt.f32.partialorder %v373, 0.0004427343
    %v375 = vsel %vm374, %v372, %v369
    %v376 = vadd.f32 %v366, 1.0
    %v377 = vlog2.pop %v376
    %v378 = vmul.f32 %v377, 0.6931472
    %v379 = vmul.f32 -0.5, %v366
    %v380 = vadd.f32 %v379, 1.0
    %v381 = vmul.f32 %v380, %v366
    %v382 = vand.u32 2147483647, %v366
    %vm383 = vcmp.lt.f32.partialorder %v382, 0.0004427343
    %v384 = vsel %vm383, %v381, %v378
    %v385 = vadd.f32 %v357, %v375
    %v386 = vadd.f32 %v358, %v384
    %v387 = vlaneseq
    %v388 = vshrl.u32 %v387, 7
    %v389 = vsub.s32 0, %v388
    %v390 = vrot.slane %v78, %v389
    %392 = vrot.lane.b32.xlu0 %v390, 64
    %v393 = vpop.permute.xlu0 %392
    %v395 = vmul.f32 %v385, %v393
    %v396 = vmul.f32 %v386, %v393
    %397 = vrot.lane.b32.xlu0 %v81, 16
    %v398 = vpop.permute.xlu0 %397
    %399 = vrot.lane.b32.xlu0 %v82, 16
    %v400 = vpop.permute.xlu0 %399
    %403 = vrot.lane.b32.xlu0 %v395, 64
    %v404 = vpop.permute.xlu0 %403
    %405 = vrot.lane.b32.xlu0 %v396, 64
    %v406 = vpop.permute.xlu0 %405
    %vm409 = vcmask 130048
    %v410 = vsel %vm409, %v398, 0
    %v412 = vsel %vm409, %v400, 0
    %414 = vmatprep.subr.mxu0 0.0
    %415 = vmatpush1.msra.mxu0 %v404
    %416 = vmatprep.subr.mxu0 0.0
    %417 = vmatpush1.msra.mxu0 %v406
    %418 = vmatprep.subr.mxu0 0.0
    %419 = vmatpush1.msra.mxu0 0.0
    %420 = vmatprep.subr.mxu0 0.0
    %421 = vmatpush1.msra.mxu0 0.0
    %422 = vmatprep.subr.mxu0 0.0
    %423 = vmatpush1.msra.mxu0 0.0
    %424 = vmatprep.subr.mxu0 0.0
    %425 = vmatpush1.msra.mxu0 0.0
    %426 = vmatprep.subr.mxu0 0.0
    %427 = vmatpush1.msra.mxu0 0.0
    %428 = vmatprep.subr.mxu0 0.0
    %429 = vmatpush1.msra.mxu0 0.0
    %430 = vmatprep.subr.mxu0 0.0
    %431 = vmatpush1.msra.mxu0 0.0
    %432 = vmatprep.subr.mxu0 0.0
    %433 = vmatpush1.msra.mxu0 0.0
    %434 = vmatprep.subr.mxu0 0.0
    %435 = vmatpush1.msra.mxu0 0.0
    %436 = vmatprep.subr.mxu0 0.0
    %437 = vmatpush1.msra.mxu0 0.0
    %438 = vmatprep.subr.mxu0 0.0
    %439 = vmatpush1.msra.mxu0 0.0
    %440 = vmatprep.subr.mxu0 0.0
    %441 = vmatpush1.msra.mxu0 0.0
    %442 = vmatprep.subr.mxu0 0.0
    %443 = vmatpush1.msra.mxu0 0.0
    %444 = vmatprep.subr.mxu0 0.0
    %445 = vmatpush1.msra.mxu0 0.0
    %446 = vmatprep.subr.mxu0 0.0
    %447 = vmatpush1.msra.mxu0 0.0
    %448 = vmatprep.subr.mxu0 0.0
    %449 = vmatpush1.msra.mxu0 0.0
    %450 = vmatprep.subr.mxu0 0.0
    %451 = vmatpush1.msra.mxu0 0.0
    %452 = vmatprep.subr.mxu0 0.0
    %453 = vmatpush1.msra.mxu0 0.0
    %454 = vmatprep.subr.mxu0 0.0
    %455 = vmatpush1.msra.mxu0 0.0
    %456 = vmatprep.subr.mxu0 0.0
    %457 = vmatpush1.msra.mxu0 0.0
    %458 = vmatprep.subr.mxu0 0.0
    %459 = vmatpush1.msra.mxu0 0.0
    %460 = vmatprep.subr.mxu0 0.0
    %461 = vmatpush1.msra.mxu0 0.0
    %462 = vmatprep.subr.mxu0 0.0
    %463 = vmatpush1.msra.mxu0 0.0
    %464 = vmatprep.subr.mxu0 0.0
    %465 = vmatpush1.msra.mxu0 0.0
    %466 = vmatprep.subr.mxu0 0.0
    %467 = vmatpush1.msra.mxu0 0.0
    %468 = vmatprep.subr.mxu0 0.0
    %469 = vmatpush1.msra.mxu0 0.0
    %470 = vmatprep.subr.mxu0 0.0
    %471 = vmatpush1.msra.mxu0 0.0
    %472 = vmatprep.subr.mxu0 0.0
    %473 = vmatpush1.msra.mxu0 0.0
    %474 = vmatprep.subr.mxu0 0.0
    %475 = vmatpush1.msra.mxu0 0.0
    %476 = vmatprep.subr.mxu0 0.0
    %477 = vmatpush1.msra.mxu0 0.0
    %478 = vmatprep.mubr.f32.mxu0 0.0
    %479 = vmatmul.mubr.f32.gmra.mrb[0].mxu0 %v410
    %v480 = vpop.f32.mrb[0].mxu0
    %v481 = vadd.f32 0.0, %v480
    %v482 = vpop.f32.mrb[0].mxu0
    %483 = vmatprep.mubr.f32.mxu0 0.0
    %484 = vmatmul.mubr.f32.gmra.mrb[0].mxu0 %v412
    %v485 = vpop.f32.mrb[0].mxu0
    %v486 = vadd.f32 0.0, %v485
    %v487 = vpop.f32.mrb[0].mxu0
    %488 = vdwg.mxu0
    %489 = vxpose.xlu0.b32.start [1/16] %v481, 128
    %490 = vxpose.xlu0.b32.cont [2/16] %v486, 128
    %491 = vxpose.xlu0.b32.cont [3/16] 0.0, 128
    %492 = vxpose.xlu0.b32.cont [4/16] 0.0, 128
    %493 = vxpose.xlu0.b32.cont [5/16] 0.0, 128
    %494 = vxpose.xlu0.b32.cont [6/16] 0.0, 128
    %495 = vxpose.xlu0.b32.cont [7/16] 0.0, 128
    %496 = vxpose.xlu0.b32.cont [8/16] 0.0, 128
    %497 = vxpose.xlu0.b32.cont [9/16] 0.0, 128
    %498 = vxpose.xlu0.b32.cont [10/16] 0.0, 128
    %499 = vxpose.xlu0.b32.cont [11/16] 0.0, 128
    %500 = vxpose.xlu0.b32.cont [12/16] 0.0, 128
    %501 = vxpose.xlu0.b32.cont [13/16] 0.0, 128
    %502 = vxpose.xlu0.b32.cont [14/16] 0.0, 128
    %503 = vxpose.xlu0.b32.cont [15/16] 0.0, 128
    %504 = vxpose.xlu0.b32.end [16/16] 0.0, 128
    %v505 = vpop.trf.xlu0
    %v506 = vpop.trf.xlu0
    %v507 = vpop.trf.xlu0
    %v508 = vpop.trf.xlu0
    %v509 = vpop.trf.xlu0
    %v510 = vpop.trf.xlu0
    %v511 = vpop.trf.xlu0
    %v512 = vpop.trf.xlu0
    %v513 = vpop.trf.xlu0
    %v514 = vpop.trf.xlu0
    %v515 = vpop.trf.xlu0
    %v516 = vpop.trf.xlu0
    %v517 = vpop.trf.xlu0
    %v518 = vpop.trf.xlu0
    %v519 = vpop.trf.xlu0
    %v520 = vpop.trf.xlu0
    %v521 = vlaneseq
    %v522 = vshrl.u32 %v521, 7
    %v523 = vsub.s32 0, %v522
    %v524 = vrot.slane %v505, %v523
    %526 = vbcast.lane.b32.xlu0 %v524, 256
    %v527 = vpop.permute.xlu0 %526
    %s529 = sor.u32 256, 8
    %530 = vbcast.lane.b32.xlu0 %v524, %s529
    %v531 = vpop.permute.xlu0 %530
    %v532 = vlaneseq
    %v533 = vshrl.u32 %v532, 7
    %v534 = vsub.s32 1, %v533
    %v535 = vrot.slane %v505, %v534
    %537 = vbcast.lane.b32.xlu0 %v535, 256
    %v538 = vpop.permute.xlu0 %537
    %s540 = sor.u32 256, 8
    %541 = vbcast.lane.b32.xlu0 %v535, %s540
    %v542 = vpop.permute.xlu0 %541
    %v543 = vlaneseq
    %v544 = vshrl.u32 %v543, 7
    %v545 = vsub.s32 2, %v544
    %v546 = vrot.slane %v505, %v545
    %548 = vbcast.lane.b32.xlu0 %v546, 256
    %v549 = vpop.permute.xlu0 %548
    %s551 = sor.u32 256, 8
    %552 = vbcast.lane.b32.xlu0 %v546, %s551
    %v553 = vpop.permute.xlu0 %552
    %v554 = vlaneseq
    %v555 = vshrl.u32 %v554, 7
    %v556 = vsub.s32 3, %v555
    %v557 = vrot.slane %v505, %v556
    %559 = vbcast.lane.b32.xlu0 %v557, 256
    %v560 = vpop.permute.xlu0 %559
    %s562 = sor.u32 256, 8
    %563 = vbcast.lane.b32.xlu0 %v557, %s562
    %v564 = vpop.permute.xlu0 %563
    %v567 = vunpack.c.l.s4 1966171168
    %v568 = vunpack.c.0.s8 %v567
    %v569 = vlaneseq
    %v570 = vshrl.u32 %v569, 7
    %v571 = vsub.s32 %v568, %v570
    %v572 = vrot.slane %v505, %v571
    %v573 = vcombine.high %v572, %v572
    %v575 = vunpack.c.l.s4 1966171168
    %v576 = vunpack.c.0.s8 %v575
    %v577 = vlaneseq
    %v578 = vshrl.u32 %v577, 7
    %v579 = vsub.s32 %v576, %v578
    %v580 = vrot.slane %v572, %v579
    %v582 = vunpack.c.l.s4 1966171168
    %v583 = vunpack.c.0.s8 %v582
    %v584 = vlaneseq
    %v585 = vshrl.u32 %v584, 7
    %v586 = vsub.s32 %v583, %v585
    %v587 = vrot.slane %v573, %v586
    %v588 = vcombine.high %v580, %v580
    %v589 = vcombine.high %v587, %v587
    %v590 = vlaneseq
    %v591 = vshrl.u32 %v590, 7
    %v592 = vsub.s32 0, %v591
    %v593 = vrot.slane %v580, %v592
    %v594 = vlaneseq
    %v595 = vshrl.u32 %v594, 7
    %v596 = vsub.s32 0, %v595
    %v597 = vrot.slane %v587, %v596
    %v598 = vlaneseq
    %v599 = vshrl.u32 %v598, 7
    %v600 = vsub.s32 0, %v599
    %v601 = vrot.slane %v588, %v600
    %v602 = vlaneseq
    %v603 = vshrl.u32 %v602, 7
    %v604 = vsub.s32 0, %v603
    %v605 = vrot.slane %v589, %v604
    %v610 = vsub.f32 %v527, %v593
    %v611 = vsub.f32 %v531, %v593
    %v612 = vsub.f32 %v538, %v597
    %v613 = vsub.f32 %v542, %v597
    %v614 = vsub.f32 %v549, %v601
    %v615 = vsub.f32 %v553, %v601
    %v616 = vsub.f32 %v560, %v605
    %v617 = vsub.f32 %v564, %v605
    %v618 = vmin.f32 %v610, 0.0
    %v619 = vmin.f32 %v611, 0.0
    %v620 = vmin.f32 %v612, 0.0
    %v621 = vmin.f32 %v613, 0.0
    %v622 = vmin.f32 %v614, 0.0
    %v623 = vmin.f32 %v615, 0.0
    %v624 = vmin.f32 %v616, 0.0
    %v625 = vmin.f32 %v617, 0.0
    %v626 = vmul.f32 %v618, 1.442695
    %v627 = vpow.pop %v626
    %v628 = vmul.f32 %v619, 1.442695
    %v629 = vpow.pop %v628
    %v630 = vmul.f32 %v620, 1.442695
    %v631 = vpow.pop %v630
    %v632 = vmul.f32 %v621, 1.442695
    %v633 = vpow.pop %v632
    %v634 = vmul.f32 %v622, 1.442695
    %v635 = vpow.pop %v634
    %v636 = vmul.f32 %v623, 1.442695
    %v637 = vpow.pop %v636
    %v638 = vmul.f32 %v624, 1.442695
    %v639 = vpow.pop %v638
    %v640 = vmul.f32 %v625, 1.442695
    %v641 = vpow.pop %v640
    %v644 = vmul.f32 %v627, %v398
    %v645 = vmul.f32 %v629, %v400
    %v646 = vmul.f32 %v631, %v398
    %v647 = vmul.f32 %v633, %v400
    %v648 = vmul.f32 %v635, %v398
    %v649 = vmul.f32 %v637, %v400
    %v650 = vmul.f32 %v639, %v398
    %v651 = vmul.f32 %v641, %v400
    %653 = vset.pattern.permute.xlu0 64
    %654 = vperm.xlu0 %653, %v385
    %v655 = vpop.permute.xlu0 %654
    %658 = vset.pattern.permute.xlu0 64
    %659 = vperm.xlu0 %658, %v386
    %v660 = vpop.permute.xlu0 %659
    %v662 = vmul.f32 %v345, %v655
    %v663 = vmul.f32 %v346, %v660
    %664 = vset.pattern.permute.xlu0 65
    %665 = vperm.xlu0 %664, %v385
    %v666 = vpop.permute.xlu0 %665
    %668 = vset.pattern.permute.xlu0 65
    %669 = vperm.xlu0 %668, %v386
    %v670 = vpop.permute.xlu0 %669
    %v672 = vmul.f32 %v345, %v666
    %v673 = vmul.f32 %v346, %v670
    %674 = vset.pattern.permute.xlu0 66
    %675 = vperm.xlu0 %674, %v385
    %v676 = vpop.permute.xlu0 %675
    %678 = vset.pattern.permute.xlu0 66
    %679 = vperm.xlu0 %678, %v386
    %v680 = vpop.permute.xlu0 %679
    %v682 = vmul.f32 %v345, %v676
    %v683 = vmul.f32 %v346, %v680
    %684 = vset.pattern.permute.xlu0 67
    %685 = vperm.xlu0 %684, %v385
    %v686 = vpop.permute.xlu0 %685
    %688 = vset.pattern.permute.xlu0 67
    %689 = vperm.xlu0 %688, %v386
    %v690 = vpop.permute.xlu0 %689
    %v692 = vmul.f32 %v345, %v686
    %v693 = vmul.f32 %v346, %v690
    %696 = vrot.lane.b32.xlu0 %v345, 112
    %v697 = vpop.permute.xlu0 %696
    %698 = vrot.lane.b32.xlu0 %v346, 112
    %v699 = vpop.permute.xlu0 %698
    %700 = vrot.lane.b32.xlu0 %v345, 96
    %v701 = vpop.permute.xlu0 %700
    %702 = vrot.lane.b32.xlu0 %v346, 96
    %v703 = vpop.permute.xlu0 %702
    %704 = vrot.lane.b32.xlu0 %v345, 80
    %v705 = vpop.permute.xlu0 %704
    %706 = vrot.lane.b32.xlu0 %v346, 80
    %v707 = vpop.permute.xlu0 %706
    %710 = vrot.lane.b32.xlu0 %v662, 112
    %v711 = vpop.permute.xlu0 %710
    %712 = vrot.lane.b32.xlu0 %v663, 112
    %v713 = vpop.permute.xlu0 %712
    %v714 = vsel %vm409, %v701, 0
    %v716 = vsel %vm409, %v703, 0
    %v718 = vsel %vm409, %v711, 0
    %v720 = vsel %vm409, %v713, 0
    %722 = vmatprep.subr.mxu0 0.0
    %723 = vmatpush1.xpose.msra.mxu0 %v718
    %724 = vmatprep.subr.mxu0 0.0
    %725 = vmatpush1.xpose.msra.mxu0 %v720
    %726 = vmatprep.subr.mxu0 0.0
    %727 = vmatpush1.xpose.msra.mxu0 0.0
    %728 = vmatprep.subr.mxu0 0.0
    %729 = vmatpush1.xpose.msra.mxu0 0.0
    %730 = vmatprep.subr.mxu0 0.0
    %731 = vmatpush1.xpose.msra.mxu0 0.0
    %732 = vmatprep.subr.mxu0 0.0
    %733 = vmatpush1.xpose.msra.mxu0 0.0
    %734 = vmatprep.subr.mxu0 0.0
    %735 = vmatpush1.xpose.msra.mxu0 0.0
    %736 = vmatprep.subr.mxu0 0.0
    %737 = vmatpush1.xpose.msra.mxu0 0.0
    %738 = vmatprep.subr.mxu0 0.0
    %739 = vmatpush1.xpose.msra.mxu0 0.0
    %740 = vmatprep.subr.mxu0 0.0
    %741 = vmatpush1.xpose.msra.mxu0 0.0
    %742 = vmatprep.subr.mxu0 0.0
    %743 = vmatpush1.xpose.msra.mxu0 0.0
    %744 = vmatprep.subr.mxu0 0.0
    %745 = vmatpush1.xpose.msra.mxu0 0.0
    %746 = vmatprep.subr.mxu0 0.0
    %747 = vmatpush1.xpose.msra.mxu0 0.0
    %748 = vmatprep.subr.mxu0 0.0
    %749 = vmatpush1.xpose.msra.mxu0 0.0
    %750 = vmatprep.subr.mxu0 0.0
    %751 = vmatpush1.xpose.msra.mxu0 0.0
    %752 = vmatprep.subr.mxu0 0.0
    %753 = vmatpush1.xpose.msra.mxu0 0.0
    %754 = vmatprep.subr.mxu0 0.0
    %755 = vmatpush1.xpose.msra.mxu0 0.0
    %756 = vmatprep.subr.mxu0 0.0
    %757 = vmatpush1.xpose.msra.mxu0 0.0
    %758 = vmatprep.subr.mxu0 0.0
    %759 = vmatpush1.xpose.msra.mxu0 0.0
    %760 = vmatprep.subr.mxu0 0.0
    %761 = vmatpush1.xpose.msra.mxu0 0.0
    %762 = vmatprep.subr.mxu0 0.0
    %763 = vmatpush1.xpose.msra.mxu0 0.0
    %764 = vmatprep.subr.mxu0 0.0
    %765 = vmatpush1.xpose.msra.mxu0 0.0
    %766 = vmatprep.subr.mxu0 0.0
    %767 = vmatpush1.xpose.msra.mxu0 0.0
    %768 = vmatprep.subr.mxu0 0.0
    %769 = vmatpush1.xpose.msra.mxu0 0.0
    %770 = vmatprep.subr.mxu0 0.0
    %771 = vmatpush1.xpose.msra.mxu0 0.0
    %772 = vmatprep.subr.mxu0 0.0
    %773 = vmatpush1.xpose.msra.mxu0 0.0
    %774 = vmatprep.subr.mxu0 0.0
    %775 = vmatpush1.xpose.msra.mxu0 0.0
    %776 = vmatprep.subr.mxu0 0.0
    %777 = vmatpush1.xpose.msra.mxu0 0.0
    %778 = vmatprep.subr.mxu0 0.0
    %779 = vmatpush1.xpose.msra.mxu0 0.0
    %780 = vmatprep.subr.mxu0 0.0
    %781 = vmatpush1.xpose.msra.mxu0 0.0
    %782 = vmatprep.subr.mxu0 0.0
    %783 = vmatpush1.xpose.msra.mxu0 0.0
    %784 = vmatprep.subr.mxu0 0.0
    %785 = vmatpush1.xpose.msra.mxu0 0.0
    %786 = vmatprep.mubr.f32.mxu0 0.0
    %787 = vmatmul.mubr.f32.gmra.mrb[0].mxu0 %v714
    %v788 = vpop.f32.mrb[0].mxu0
    %v789 = vadd.f32 0.0, %v788
    %v790 = vpop.f32.mrb[0].mxu0
    %791 = vmatprep.mubr.f32.mxu0 0.0
    %792 = vmatmul.mubr.f32.gmra.mrb[0].mxu0 %v716
    %v793 = vpop.f32.mrb[0].mxu0
    %v794 = vadd.f32 0.0, %v793
    %v795 = vpop.f32.mrb[0].mxu0
    %796 = vdwg.mxu0
    %797 = vrot.lane.b32.xlu0 %v697, 96
    %v798 = vpop.permute.xlu0 %797
    %799 = vrot.lane.b32.xlu0 %v699, 96
    %v800 = vpop.permute.xlu0 %799
    %803 = vrot.lane.b32.xlu0 %v672, 112
    %v804 = vpop.permute.xlu0 %803
    %805 = vrot.lane.b32.xlu0 %v673, 112
    %v806 = vpop.permute.xlu0 %805
    %v807 = vsel %vm409, %v798, 0
    %v809 = vsel %vm409, %v800, 0
    %v811 = vsel %vm409, %v804, 0
    %v813 = vsel %vm409, %v806, 0
    %815 = vmatprep.subr.mxu0 0.0
    %816 = vmatpush1.xpose.msra.mxu0 %v811
    %817 = vmatprep.subr.mxu0 0.0
    %818 = vmatpush1.xpose.msra.mxu0 %v813
    %819 = vmatprep.subr.mxu0 0.0
    %820 = vmatpush1.xpose.msra.mxu0 0.0
    %821 = vmatprep.subr.mxu0 0.0
    %822 = vmatpush1.xpose.msra.mxu0 0.0
    %823 = vmatprep.subr.mxu0 0.0
    %824 = vmatpush1.xpose.msra.mxu0 0.0
    %825 = vmatprep.subr.mxu0 0.0
    %826 = vmatpush1.xpose.msra.mxu0 0.0
    %827 = vmatprep.subr.mxu0 0.0
    %828 = vmatpush1.xpose.msra.mxu0 0.0
    %829 = vmatprep.subr.mxu0 0.0
    %830 = vmatpush1.xpose.msra.mxu0 0.0
    %831 = vmatprep.subr.mxu0 0.0
    %832 = vmatpush1.xpose.msra.mxu0 0.0
    %833 = vmatprep.subr.mxu0 0.0
    %834 = vmatpush1.xpose.msra.mxu0 0.0
    %835 = vmatprep.subr.mxu0 0.0
    %836 = vmatpush1.xpose.msra.mxu0 0.0
    %837 = vmatprep.subr.mxu0 0.0
    %838 = vmatpush1.xpose.msra.mxu0 0.0
    %839 = vmatprep.subr.mxu0 0.0
    %840 = vmatpush1.xpose.msra.mxu0 0.0
    %841 = vmatprep.subr.mxu0 0.0
    %842 = vmatpush1.xpose.msra.mxu0 0.0
    %843 = vmatprep.subr.mxu0 0.0
    %844 = vmatpush1.xpose.msra.mxu0 0.0
    %845 = vmatprep.subr.mxu0 0.0
    %846 = vmatpush1.xpose.msra.mxu0 0.0
    %847 = vmatprep.subr.mxu0 0.0
    %848 = vmatpush1.xpose.msra.mxu0 0.0
    %849 = vmatprep.subr.mxu0 0.0
    %850 = vmatpush1.xpose.msra.mxu0 0.0
    %851 = vmatprep.subr.mxu0 0.0
    %852 = vmatpush1.xpose.msra.mxu0 0.0
    %853 = vmatprep.subr.mxu0 0.0
    %854 = vmatpush1.xpose.msra.mxu0 0.0
    %855 = vmatprep.subr.mxu0 0.0
    %856 = vmatpush1.xpose.msra.mxu0 0.0
    %857 = vmatprep.subr.mxu0 0.0
    %858 = vmatpush1.xpose.msra.mxu0 0.0
    %859 = vmatprep.subr.mxu0 0.0
    %860 = vmatpush1.xpose.msra.mxu0 0.0
    %861 = vmatprep.subr.mxu0 0.0
    %862 = vmatpush1.xpose.msra.mxu0 0.0
    %863 = vmatprep.subr.mxu0 0.0
    %864 = vmatpush1.xpose.msra.mxu0 0.0
    %865 = vmatprep.subr.mxu0 0.0
    %866 = vmatpush1.xpose.msra.mxu0 0.0
    %867 = vmatprep.subr.mxu0 0.0
    %868 = vmatpush1.xpose.msra.mxu0 0.0
    %869 = vmatprep.subr.mxu0 0.0
    %870 = vmatpush1.xpose.msra.mxu0 0.0
    %871 = vmatprep.subr.mxu0 0.0
    %872 = vmatpush1.xpose.msra.mxu0 0.0
    %873 = vmatprep.subr.mxu0 0.0
    %874 = vmatpush1.xpose.msra.mxu0 0.0
    %875 = vmatprep.subr.mxu0 0.0
    %876 = vmatpush1.xpose.msra.mxu0 0.0
    %877 = vmatprep.subr.mxu0 0.0
    %878 = vmatpush1.xpose.msra.mxu0 0.0
    %879 = vmatprep.mubr.f32.mxu0 0.0
    %880 = vmatmul.mubr.f32.gmra.mrb[0].mxu0 %v807
    %v881 = vpop.f32.mrb[0].mxu0
    %v882 = vadd.f32 0.0, %v881
    %v883 = vpop.f32.mrb[0].mxu0
    %884 = vmatprep.mubr.f32.mxu0 0.0
    %885 = vmatmul.mubr.f32.gmra.mrb[0].mxu0 %v809
    %v886 = vpop.f32.mrb[0].mxu0
    %v887 = vadd.f32 0.0, %v886
    %v888 = vpop.f32.mrb[0].mxu0
    %889 = vdwg.mxu0
    %890 = vrot.lane.b32.xlu0 %v701, 96
    %v891 = vpop.permute.xlu0 %890
    %892 = vrot.lane.b32.xlu0 %v703, 96
    %v893 = vpop.permute.xlu0 %892
    %896 = vrot.lane.b32.xlu0 %v682, 112
    %v897 = vpop.permute.xlu0 %896
    %898 = vrot.lane.b32.xlu0 %v683, 112
    %v899 = vpop.permute.xlu0 %898
    %v900 = vsel %vm409, %v891, 0
    %v902 = vsel %vm409, %v893, 0
    %v904 = vsel %vm409, %v897, 0
    %v906 = vsel %vm409, %v899, 0
    %908 = vmatprep.subr.mxu0 0.0
    %909 = vmatpush1.xpose.msra.mxu0 %v904
    %910 = vmatprep.subr.mxu0 0.0
    %911 = vmatpush1.xpose.msra.mxu0 %v906
    %912 = vmatprep.subr.mxu0 0.0
    %913 = vmatpush1.xpose.msra.mxu0 0.0
    %914 = vmatprep.subr.mxu0 0.0
    %915 = vmatpush1.xpose.msra.mxu0 0.0
    %916 = vmatprep.subr.mxu0 0.0
    %917 = vmatpush1.xpose.msra.mxu0 0.0
    %918 = vmatprep.subr.mxu0 0.0
    %919 = vmatpush1.xpose.msra.mxu0 0.0
    %920 = vmatprep.subr.mxu0 0.0
    %921 = vmatpush1.xpose.msra.mxu0 0.0
    %922 = vmatprep.subr.mxu0 0.0
    %923 = vmatpush1.xpose.msra.mxu0 0.0
    %924 = vmatprep.subr.mxu0 0.0
    %925 = vmatpush1.xpose.msra.mxu0 0.0
    %926 = vmatprep.subr.mxu0 0.0
    %927 = vmatpush1.xpose.msra.mxu0 0.0
    %928 = vmatprep.subr.mxu0 0.0
    %929 = vmatpush1.xpose.msra.mxu0 0.0
    %930 = vmatprep.subr.mxu0 0.0
    %931 = vmatpush1.xpose.msra.mxu0 0.0
    %932 = vmatprep.subr.mxu0 0.0
    %933 = vmatpush1.xpose.msra.mxu0 0.0
    %934 = vmatprep.subr.mxu0 0.0
    %935 = vmatpush1.xpose.msra.mxu0 0.0
    %936 = vmatprep.subr.mxu0 0.0
    %937 = vmatpush1.xpose.msra.mxu0 0.0
    %938 = vmatprep.subr.mxu0 0.0
    %939 = vmatpush1.xpose.msra.mxu0 0.0
    %940 = vmatprep.subr.mxu0 0.0
    %941 = vmatpush1.xpose.msra.mxu0 0.0
    %942 = vmatprep.subr.mxu0 0.0
    %943 = vmatpush1.xpose.msra.mxu0 0.0
    %944 = vmatprep.subr.mxu0 0.0
    %945 = vmatpush1.xpose.msra.mxu0 0.0
    %946 = vmatprep.subr.mxu0 0.0
    %947 = vmatpush1.xpose.msra.mxu0 0.0
    %948 = vmatprep.subr.mxu0 0.0
    %949 = vmatpush1.xpose.msra.mxu0 0.0
    %950 = vmatprep.subr.mxu0 0.0
    %951 = vmatpush1.xpose.msra.mxu0 0.0
    %952 = vmatprep.subr.mxu0 0.0
    %953 = vmatpush1.xpose.msra.mxu0 0.0
    %954 = vmatprep.subr.mxu0 0.0
    %955 = vmatpush1.xpose.msra.mxu0 0.0
    %956 = vmatprep.subr.mxu0 0.0
    %957 = vmatpush1.xpose.msra.mxu0 0.0
    %958 = vmatprep.subr.mxu0 0.0
    %959 = vmatpush1.xpose.msra.mxu0 0.0
    %960 = vmatprep.subr.mxu0 0.0
    %961 = vmatpush1.xpose.msra.mxu0 0.0
    %962 = vmatprep.subr.mxu0 0.0
    %963 = vmatpush1.xpose.msra.mxu0 0.0
    %964 = vmatprep.subr.mxu0 0.0
    %965 = vmatpush1.xpose.msra.mxu0 0.0
    %966 = vmatprep.subr.mxu0 0.0
    %967 = vmatpush1.xpose.msra.mxu0 0.0
    %968 = vmatprep.subr.mxu0 0.0
    %969 = vmatpush1.xpose.msra.mxu0 0.0
    %970 = vmatprep.subr.mxu0 0.0
    %971 = vmatpush1.xpose.msra.mxu0 0.0
    %972 = vmatprep.mubr.f32.mxu0 0.0
    %973 = vmatmul.mubr.f32.gmra.mrb[0].mxu0 %v900
    %v974 = vpop.f32.mrb[0].mxu0
    %v975 = vadd.f32 0.0, %v974
    %v976 = vpop.f32.mrb[0].mxu0
    %977 = vmatprep.mubr.f32.mxu0 0.0
    %978 = vmatmul.mubr.f32.gmra.mrb[0].mxu0 %v902
    %v979 = vpop.f32.mrb[0].mxu0
    %v980 = vadd.f32 0.0, %v979
    %v981 = vpop.f32.mrb[0].mxu0
    %982 = vdwg.mxu0
    %983 = vrot.lane.b32.xlu0 %v705, 96
    %v984 = vpop.permute.xlu0 %983
    %985 = vrot.lane.b32.xlu0 %v707, 96
    %v986 = vpop.permute.xlu0 %985
    %989 = vrot.lane.b32.xlu0 %v692, 112
    %v990 = vpop.permute.xlu0 %989
    %991 = vrot.lane.b32.xlu0 %v693, 112
    %v992 = vpop.permute.xlu0 %991
    %v993 = vsel %vm409, %v984, 0
    %v995 = vsel %vm409, %v986, 0
    %v997 = vsel %vm409, %v990, 0
    %v999 = vsel %vm409, %v992, 0
    %1001 = vmatprep.subr.mxu0 0.0
    %1002 = vmatpush1.xpose.msra.mxu0 %v997
    %1003 = vmatprep.subr.mxu0 0.0
    %1004 = vmatpush1.xpose.msra.mxu0 %v999
    %1005 = vmatprep.subr.mxu0 0.0
    %1006 = vmatpush1.xpose.msra.mxu0 0.0
    %1007 = vmatprep.subr.mxu0 0.0
    %1008 = vmatpush1.xpose.msra.mxu0 0.0
    %1009 = vmatprep.subr.mxu0 0.0
    %1010 = vmatpush1.xpose.msra.mxu0 0.0
    %1011 = vmatprep.subr.mxu0 0.0
    %1012 = vmatpush1.xpose.msra.mxu0 0.0
    %1013 = vmatprep.subr.mxu0 0.0
    %1014 = vmatpush1.xpose.msra.mxu0 0.0
    %1015 = vmatprep.subr.mxu0 0.0
    %1016 = vmatpush1.xpose.msra.mxu0 0.0
    %1017 = vmatprep.subr.mxu0 0.0
    %1018 = vmatpush1.xpose.msra.mxu0 0.0
    %1019 = vmatprep.subr.mxu0 0.0
    %1020 = vmatpush1.xpose.msra.mxu0 0.0
    %1021 = vmatprep.subr.mxu0 0.0
    %1022 = vmatpush1.xpose.msra.mxu0 0.0
    %1023 = vmatprep.subr.mxu0 0.0
    %1024 = vmatpush1.xpose.msra.mxu0 0.0
    %1025 = vmatprep.subr.mxu0 0.0
    %1026 = vmatpush1.xpose.msra.mxu0 0.0
    %1027 = vmatprep.subr.mxu0 0.0
    %1028 = vmatpush1.xpose.msra.mxu0 0.0
    %1029 = vmatprep.subr.mxu0 0.0
    %1030 = vmatpush1.xpose.msra.mxu0 0.0
    %1031 = vmatprep.subr.mxu0 0.0
    %1032 = vmatpush1.xpose.msra.mxu0 0.0
    %1033 = vmatprep.subr.mxu0 0.0
    %1034 = vmatpush1.xpose.msra.mxu0 0.0
    %1035 = vmatprep.subr.mxu0 0.0
    %1036 = vmatpush1.xpose.msra.mxu0 0.0
    %1037 = vmatprep.subr.mxu0 0.0
    %1038 = vmatpush1.xpose.msra.mxu0 0.0
    %1039 = vmatprep.subr.mxu0 0.0
    %1040 = vmatpush1.xpose.msra.mxu0 0.0
    %1041 = vmatprep.subr.mxu0 0.0
    %1042 = vmatpush1.xpose.msra.mxu0 0.0
    %1043 = vmatprep.subr.mxu0 0.0
    %1044 = vmatpush1.xpose.msra.mxu0 0.0
    %1045 = vmatprep.subr.mxu0 0.0
    %1046 = vmatpush1.xpose.msra.mxu0 0.0
    %1047 = vmatprep.subr.mxu0 0.0
    %1048 = vmatpush1.xpose.msra.mxu0 0.0
    %1049 = vmatprep.subr.mxu0 0.0
    %1050 = vmatpush1.xpose.msra.mxu0 0.0
    %1051 = vmatprep.subr.mxu0 0.0
    %1052 = vmatpush1.xpose.msra.mxu0 0.0
    %1053 = vmatprep.subr.mxu0 0.0
    %1054 = vmatpush1.xpose.msra.mxu0 0.0
    %1055 = vmatprep.subr.mxu0 0.0
    %1056 = vmatpush1.xpose.msra.mxu0 0.0
    %1057 = vmatprep.subr.mxu0 0.0
    %1058 = vmatpush1.xpose.msra.mxu0 0.0
    %1059 = vmatprep.subr.mxu0 0.0
    %1060 = vmatpush1.xpose.msra.mxu0 0.0
    %1061 = vmatprep.subr.mxu0 0.0
    %1062 = vmatpush1.xpose.msra.mxu0 0.0
    %1063 = vmatprep.subr.mxu0 0.0
    %1064 = vmatpush1.xpose.msra.mxu0 0.0
    %1065 = vmatprep.mubr.f32.mxu0 0.0
    %1066 = vmatmul.mubr.f32.gmra.mrb[0].mxu0 %v993
    %v1067 = vpop.f32.mrb[0].mxu0
    %v1068 = vadd.f32 0.0, %v1067
    %v1069 = vpop.f32.mrb[0].mxu0
    %1070 = vmatprep.mubr.f32.mxu0 0.0
    %1071 = vmatmul.mubr.f32.gmra.mrb[0].mxu0 %v995
    %v1072 = vpop.f32.mrb[0].mxu0
    %v1073 = vadd.f32 0.0, %v1072
    %v1074 = vpop.f32.mrb[0].mxu0
    %1075 = vdwg.mxu0
    %v1076 = vmul.f32 %v644, %v789
    %v1077 = vmul.f32 %v645, %v794
    %v1078 = vmul.f32 %v646, %v882
    %v1079 = vmul.f32 %v647, %v887
    %v1080 = vmul.f32 %v648, %v975
    %v1081 = vmul.f32 %v649, %v980
    %v1082 = vmul.f32 %v650, %v1068
    %v1083 = vmul.f32 %v651, %v1073
    %v1085 = vsel %vm409, %v1076, 0
    %v1088 = vsel %vm409, %v1077, 0
    %1090 = vmatprep.subr.mxu0 0.0
    %1091 = vmatpush1.msra.mxu0 %v345
    %1092 = vmatprep.subr.mxu0 0.0
    %1093 = vmatpush1.msra.mxu0 %v346
    %1094 = vmatprep.subr.mxu0 0.0
    %1095 = vmatpush1.msra.mxu0 0.0
    %1096 = vmatprep.subr.mxu0 0.0
    %1097 = vmatpush1.msra.mxu0 0.0
    %1098 = vmatprep.subr.mxu0 0.0
    %1099 = vmatpush1.msra.mxu0 0.0
    %1100 = vmatprep.subr.mxu0 0.0
    %1101 = vmatpush1.msra.mxu0 0.0
    %1102 = vmatprep.subr.mxu0 0.0
    %1103 = vmatpush1.msra.mxu0 0.0
    %1104 = vmatprep.subr.mxu0 0.0
    %1105 = vmatpush1.msra.mxu0 0.0
    %1106 = vmatprep.subr.mxu0 0.0
    %1107 = vmatpush1.msra.mxu0 0.0
    %1108 = vmatprep.subr.mxu0 0.0
    %1109 = vmatpush1.msra.mxu0 0.0
    %1110 = vmatprep.subr.mxu0 0.0
    %1111 = vmatpush1.msra.mxu0 0.0
    %1112 = vmatprep.subr.mxu0 0.0
    %1113 = vmatpush1.msra.mxu0 0.0
    %1114 = vmatprep.subr.mxu0 0.0
    %1115 = vmatpush1.msra.mxu0 0.0
    %1116 = vmatprep.subr.mxu0 0.0
    %1117 = vmatpush1.msra.mxu0 0.0
    %1118 = vmatprep.subr.mxu0 0.0
    %1119 = vmatpush1.msra.mxu0 0.0
    %1120 = vmatprep.subr.mxu0 0.0
    %1121 = vmatpush1.msra.mxu0 0.0
    %1122 = vmatprep.subr.mxu0 0.0
    %1123 = vmatpush1.msra.mxu0 0.0
    %1124 = vmatprep.subr.mxu0 0.0
    %1125 = vmatpush1.msra.mxu0 0.0
    %1126 = vmatprep.subr.mxu0 0.0
    %1127 = vmatpush1.msra.mxu0 0.0
    %1128 = vmatprep.subr.mxu0 0.0
    %1129 = vmatpush1.msra.mxu0 0.0
    %1130 = vmatprep.subr.mxu0 0.0
    %1131 = vmatpush1.msra.mxu0 0.0
    %1132 = vmatprep.subr.mxu0 0.0
    %1133 = vmatpush1.msra.mxu0 0.0
    %1134 = vmatprep.subr.mxu0 0.0
    %1135 = vmatpush1.msra.mxu0 0.0
    %1136 = vmatprep.subr.mxu0 0.0
    %1137 = vmatpush1.msra.mxu0 0.0
    %1138 = vmatprep.subr.mxu0 0.0
    %1139 = vmatpush1.msra.mxu0 0.0
    %1140 = vmatprep.subr.mxu0 0.0
    %1141 = vmatpush1.msra.mxu0 0.0
    %1142 = vmatprep.subr.mxu0 0.0
    %1143 = vmatpush1.msra.mxu0 0.0
    %1144 = vmatprep.subr.mxu0 0.0
    %1145 = vmatpush1.msra.mxu0 0.0
    %1146 = vmatprep.subr.mxu0 0.0
    %1147 = vmatpush1.msra.mxu0 0.0
    %1148 = vmatprep.subr.mxu0 0.0
    %1149 = vmatpush1.msra.mxu0 0.0
    %1150 = vmatprep.subr.mxu0 0.0
    %1151 = vmatpush1.msra.mxu0 0.0
    %1152 = vmatprep.subr.mxu0 0.0
    %1153 = vmatpush1.msra.mxu0 0.0
    %1154 = vmatprep.mubr.f32.mxu0 0.0
    %1155 = vmatmul.mubr.f32.gmra.mrb[0].mxu0 %v1085
    %v1156 = vpop.f32.mrb[0].mxu0
    %v1157 = vadd.f32 0.0, %v1156
    %v1158 = vpop.f32.mrb[0].mxu0
    %1159 = vmatprep.mubr.f32.mxu0 0.0
    %1160 = vmatmul.mubr.f32.gmra.mrb[0].mxu0 %v1088
    %v1161 = vpop.f32.mrb[0].mxu0
    %v1162 = vadd.f32 0.0, %v1161
    %v1163 = vpop.f32.mrb[0].mxu0
    %1164 = vdwg.mxu0
    %v1166 = vsel %vm409, %v1078, 0
    %v1169 = vsel %vm409, %v1079, 0
    %1171 = vmatprep.subr.mxu0 0.0
    %1172 = vmatpush1.msra.mxu0 %v345
    %1173 = vmatprep.subr.mxu0 0.0
    %1174 = vmatpush1.msra.mxu0 %v346
    %1175 = vmatprep.subr.mxu0 0.0
    %1176 = vmatpush1.msra.mxu0 0.0
    %1177 = vmatprep.subr.mxu0 0.0
    %1178 = vmatpush1.msra.mxu0 0.0
    %1179 = vmatprep.subr.mxu0 0.0
    %1180 = vmatpush1.msra.mxu0 0.0
    %1181 = vmatprep.subr.mxu0 0.0
    %1182 = vmatpush1.msra.mxu0 0.0
    %1183 = vmatprep.subr.mxu0 0.0
    %1184 = vmatpush1.msra.mxu0 0.0
    %1185 = vmatprep.subr.mxu0 0.0
    %1186 = vmatpush1.msra.mxu0 0.0
    %1187 = vmatprep.subr.mxu0 0.0
    %1188 = vmatpush1.msra.mxu0 0.0
    %1189 = vmatprep.subr.mxu0 0.0
    %1190 = vmatpush1.msra.mxu0 0.0
    %1191 = vmatprep.subr.mxu0 0.0
    %1192 = vmatpush1.msra.mxu0 0.0
    %1193 = vmatprep.subr.mxu0 0.0
    %1194 = vmatpush1.msra.mxu0 0.0
    %1195 = vmatprep.subr.mxu0 0.0
    %1196 = vmatpush1.msra.mxu0 0.0
    %1197 = vmatprep.subr.mxu0 0.0
    %1198 = vmatpush1.msra.mxu0 0.0
    %1199 = vmatprep.subr.mxu0 0.0
    %1200 = vmatpush1.msra.mxu0 0.0
    %1201 = vmatprep.subr.mxu0 0.0
    %1202 = vmatpush1.msra.mxu0 0.0
    %1203 = vmatprep.subr.mxu0 0.0
    %1204 = vmatpush1.msra.mxu0 0.0
    %1205 = vmatprep.subr.mxu0 0.0
    %1206 = vmatpush1.msra.mxu0 0.0
    %1207 = vmatprep.subr.mxu0 0.0
    %1208 = vmatpush1.msra.mxu0 0.0
    %1209 = vmatprep.subr.mxu0 0.0
    %1210 = vmatpush1.msra.mxu0 0.0
    %1211 = vmatprep.subr.mxu0 0.0
    %1212 = vmatpush1.msra.mxu0 0.0
    %1213 = vmatprep.subr.mxu0 0.0
    %1214 = vmatpush1.msra.mxu0 0.0
    %1215 = vmatprep.subr.mxu0 0.0
    %1216 = vmatpush1.msra.mxu0 0.0
    %1217 = vmatprep.subr.mxu0 0.0
    %1218 = vmatpush1.msra.mxu0 0.0
    %1219 = vmatprep.subr.mxu0 0.0
    %1220 = vmatpush1.msra.mxu0 0.0
    %1221 = vmatprep.subr.mxu0 0.0
    %1222 = vmatpush1.msra.mxu0 0.0
    %1223 = vmatprep.subr.mxu0 0.0
    %1224 = vmatpush1.msra.mxu0 0.0
    %1225 = vmatprep.subr.mxu0 0.0
    %1226 = vmatpush1.msra.mxu0 0.0
    %1227 = vmatprep.subr.mxu0 0.0
    %1228 = vmatpush1.msra.mxu0 0.0
    %1229 = vmatprep.subr.mxu0 0.0
    %1230 = vmatpush1.msra.mxu0 0.0
    %1231 = vmatprep.subr.mxu0 0.0
    %1232 = vmatpush1.msra.mxu0 0.0
    %1233 = vmatprep.subr.mxu0 0.0
    %1234 = vmatpush1.msra.mxu0 0.0
    %1235 = vmatprep.mubr.f32.mxu0 0.0
    %1236 = vmatmul.mubr.f32.gmra.mrb[0].mxu0 %v1166
    %v1237 = vpop.f32.mrb[0].mxu0
    %v1238 = vadd.f32 0.0, %v1237
    %v1239 = vpop.f32.mrb[0].mxu0
    %1240 = vmatprep.mubr.f32.mxu0 0.0
    %1241 = vmatmul.mubr.f32.gmra.mrb[0].mxu0 %v1169
    %v1242 = vpop.f32.mrb[0].mxu0
    %v1243 = vadd.f32 0.0, %v1242
    %v1244 = vpop.f32.mrb[0].mxu0
    %1245 = vdwg.mxu0
    %v1247 = vsel %vm409, %v1080, 0
    %v1250 = vsel %vm409, %v1081, 0
    %1252 = vmatprep.subr.mxu0 0.0
    %1253 = vmatpush1.msra.mxu0 %v345
    %1254 = vmatprep.subr.mxu0 0.0
    %1255 = vmatpush1.msra.mxu0 %v346
    %1256 = vmatprep.subr.mxu0 0.0
    %1257 = vmatpush1.msra.mxu0 0.0
    %1258 = vmatprep.subr.mxu0 0.0
    %1259 = vmatpush1.msra.mxu0 0.0
    %1260 = vmatprep.subr.mxu0 0.0
    %1261 = vmatpush1.msra.mxu0 0.0
    %1262 = vmatprep.subr.mxu0 0.0
    %1263 = vmatpush1.msra.mxu0 0.0
    %1264 = vmatprep.subr.mxu0 0.0
    %1265 = vmatpush1.msra.mxu0 0.0
    %1266 = vmatprep.subr.mxu0 0.0
    %1267 = vmatpush1.msra.mxu0 0.0
    %1268 = vmatprep.subr.mxu0 0.0
    %1269 = vmatpush1.msra.mxu0 0.0
    %1270 = vmatprep.subr.mxu0 0.0
    %1271 = vmatpush1.msra.mxu0 0.0
    %1272 = vmatprep.subr.mxu0 0.0
    %1273 = vmatpush1.msra.mxu0 0.0
    %1274 = vmatprep.subr.mxu0 0.0
    %1275 = vmatpush1.msra.mxu0 0.0
    %1276 = vmatprep.subr.mxu0 0.0
    %1277 = vmatpush1.msra.mxu0 0.0
    %1278 = vmatprep.subr.mxu0 0.0
    %1279 = vmatpush1.msra.mxu0 0.0
    %1280 = vmatprep.subr.mxu0 0.0
    %1281 = vmatpush1.msra.mxu0 0.0
    %1282 = vmatprep.subr.mxu0 0.0
    %1283 = vmatpush1.msra.mxu0 0.0
    %1284 = vmatprep.subr.mxu0 0.0
    %1285 = vmatpush1.msra.mxu0 0.0
    %1286 = vmatprep.subr.mxu0 0.0
    %1287 = vmatpush1.msra.mxu0 0.0
    %1288 = vmatprep.subr.mxu0 0.0
    %1289 = vmatpush1.msra.mxu0 0.0
    %1290 = vmatprep.subr.mxu0 0.0
    %1291 = vmatpush1.msra.mxu0 0.0
    %1292 = vmatprep.subr.mxu0 0.0
    %1293 = vmatpush1.msra.mxu0 0.0
    %1294 = vmatprep.subr.mxu0 0.0
    %1295 = vmatpush1.msra.mxu0 0.0
    %1296 = vmatprep.subr.mxu0 0.0
    %1297 = vmatpush1.msra.mxu0 0.0
    %1298 = vmatprep.subr.mxu0 0.0
    %1299 = vmatpush1.msra.mxu0 0.0
    %1300 = vmatprep.subr.mxu0 0.0
    %1301 = vmatpush1.msra.mxu0 0.0
    %1302 = vmatprep.subr.mxu0 0.0
    %1303 = vmatpush1.msra.mxu0 0.0
    %1304 = vmatprep.subr.mxu0 0.0
    %1305 = vmatpush1.msra.mxu0 0.0
    %1306 = vmatprep.subr.mxu0 0.0
    %1307 = vmatpush1.msra.mxu0 0.0
    %1308 = vmatprep.subr.mxu0 0.0
    %1309 = vmatpush1.msra.mxu0 0.0
    %1310 = vmatprep.subr.mxu0 0.0
    %1311 = vmatpush1.msra.mxu0 0.0
    %1312 = vmatprep.subr.mxu0 0.0
    %1313 = vmatpush1.msra.mxu0 0.0
    %1314 = vmatprep.subr.mxu0 0.0
    %1315 = vmatpush1.msra.mxu0 0.0
    %1316 = vmatprep.mubr.f32.mxu0 0.0
    %1317 = vmatmul.mubr.f32.gmra.mrb[0].mxu0 %v1247
    %v1318 = vpop.f32.mrb[0].mxu0
    %v1319 = vadd.f32 0.0, %v1318
    %v1320 = vpop.f32.mrb[0].mxu0
    %1321 = vmatprep.mubr.f32.mxu0 0.0
    %1322 = vmatmul.mubr.f32.gmra.mrb[0].mxu0 %v1250
    %v1323 = vpop.f32.mrb[0].mxu0
    %v1324 = vadd.f32 0.0, %v1323
    %v1325 = vpop.f32.mrb[0].mxu0
    %1326 = vdwg.mxu0
    %v1328 = vsel %vm409, %v1082, 0
    %v1331 = vsel %vm409, %v1083, 0
    %1333 = vmatprep.subr.mxu0 0.0
    %1334 = vmatpush1.msra.mxu0 %v345
    %1335 = vmatprep.subr.mxu0 0.0
    %1336 = vmatpush1.msra.mxu0 %v346
    %1337 = vmatprep.subr.mxu0 0.0
    %1338 = vmatpush1.msra.mxu0 0.0
    %1339 = vmatprep.subr.mxu0 0.0
    %1340 = vmatpush1.msra.mxu0 0.0
    %1341 = vmatprep.subr.mxu0 0.0
    %1342 = vmatpush1.msra.mxu0 0.0
    %1343 = vmatprep.subr.mxu0 0.0
    %1344 = vmatpush1.msra.mxu0 0.0
    %1345 = vmatprep.subr.mxu0 0.0
    %1346 = vmatpush1.msra.mxu0 0.0
    %1347 = vmatprep.subr.mxu0 0.0
    %1348 = vmatpush1.msra.mxu0 0.0
    %1349 = vmatprep.subr.mxu0 0.0
    %1350 = vmatpush1.msra.mxu0 0.0
    %1351 = vmatprep.subr.mxu0 0.0
    %1352 = vmatpush1.msra.mxu0 0.0
    %1353 = vmatprep.subr.mxu0 0.0
    %1354 = vmatpush1.msra.mxu0 0.0
    %1355 = vmatprep.subr.mxu0 0.0
    %1356 = vmatpush1.msra.mxu0 0.0
    %1357 = vmatprep.subr.mxu0 0.0
    %1358 = vmatpush1.msra.mxu0 0.0
    %1359 = vmatprep.subr.mxu0 0.0
    %1360 = vmatpush1.msra.mxu0 0.0
    %1361 = vmatprep.subr.mxu0 0.0
    %1362 = vmatpush1.msra.mxu0 0.0
    %1363 = vmatprep.subr.mxu0 0.0
    %1364 = vmatpush1.msra.mxu0 0.0
    %1365 = vmatprep.subr.mxu0 0.0
    %1366 = vmatpush1.msra.mxu0 0.0
    %1367 = vmatprep.subr.mxu0 0.0
    %1368 = vmatpush1.msra.mxu0 0.0
    %1369 = vmatprep.subr.mxu0 0.0
    %1370 = vmatpush1.msra.mxu0 0.0
    %1371 = vmatprep.subr.mxu0 0.0
    %1372 = vmatpush1.msra.mxu0 0.0
    %1373 = vmatprep.subr.mxu0 0.0
    %1374 = vmatpush1.msra.mxu0 0.0
    %1375 = vmatprep.subr.mxu0 0.0
    %1376 = vmatpush1.msra.mxu0 0.0
    %1377 = vmatprep.subr.mxu0 0.0
    %1378 = vmatpush1.msra.mxu0 0.0
    %1379 = vmatprep.subr.mxu0 0.0
    %1380 = vmatpush1.msra.mxu0 0.0
    %1381 = vmatprep.subr.mxu0 0.0
    %1382 = vmatpush1.msra.mxu0 0.0
    %1383 = vmatprep.subr.mxu0 0.0
    %1384 = vmatpush1.msra.mxu0 0.0
    %1385 = vmatprep.subr.mxu0 0.0
    %1386 = vmatpush1.msra.mxu0 0.0
    %1387 = vmatprep.subr.mxu0 0.0
    %1388 = vmatpush1.msra.mxu0 0.0
    %1389 = vmatprep.subr.mxu0 0.0
    %1390 = vmatpush1.msra.mxu0 0.0
    %1391 = vmatprep.subr.mxu0 0.0
    %1392 = vmatpush1.msra.mxu0 0.0
    %1393 = vmatprep.subr.mxu0 0.0
    %1394 = vmatpush1.msra.mxu0 0.0
    %1395 = vmatprep.subr.mxu0 0.0
    %1396 = vmatpush1.msra.mxu0 0.0
    %1397 = vmatprep.mubr.f32.mxu0 0.0
    %1398 = vmatmul.mubr.f32.gmra.mrb[0].mxu0 %v1328
    %v1399 = vpop.f32.mrb[0].mxu0
    %v1400 = vadd.f32 0.0, %v1399
    %v1401 = vpop.f32.mrb[0].mxu0
    %1402 = vmatprep.mubr.f32.mxu0 0.0
    %1403 = vmatmul.mubr.f32.gmra.mrb[0].mxu0 %v1331
    %v1404 = vpop.f32.mrb[0].mxu0
    %v1405 = vadd.f32 0.0, %v1404
    %v1406 = vpop.f32.mrb[0].mxu0
    %1407 = vdwg.mxu0
    %1410 = vrot.lane.b32.xlu0 %v1238, 16
    %v1411 = vpop.permute.xlu0 %1410
    %1412 = vrot.lane.b32.xlu0 %v1243, 16
    %v1413 = vpop.permute.xlu0 %1412
    %1418 = vrot.lane.b32.xlu0 %v1319, 32
    %v1419 = vpop.permute.xlu0 %1418
    %1420 = vrot.lane.b32.xlu0 %v1324, 32
    %v1421 = vpop.permute.xlu0 %1420
    %1426 = vrot.lane.b32.xlu0 %v1400, 48
    %v1427 = vpop.permute.xlu0 %1426
    %1428 = vrot.lane.b32.xlu0 %v1405, 48
    %v1429 = vpop.permute.xlu0 %1428
    %v1432 = vsel %vm409, %v1157, %v1411
    %v1433 = vsel %vm409, %v1162, %v1413
    %v1434 = vsel %vm87, %v1432, %v1419
    %v1435 = vsel %vm87, %v1433, %v1421
    %vm1436 = vcmask 392192
    %v1437 = vsel %vm1436, %v1434, %v1427
    %v1438 = vsel %vm1436, %v1435, %v1429
    %1439 = vrot.lane.b32.xlu0 %v345, 16
    %v1440 = vpop.permute.xlu0 %1439
    %1441 = vrot.lane.b32.xlu0 %v346, 16
    %v1442 = vpop.permute.xlu0 %1441
    %1445 = vrot.lane.b32.xlu0 %v345, 32
    %v1446 = vpop.permute.xlu0 %1445
    %1447 = vrot.lane.b32.xlu0 %v346, 32
    %v1448 = vpop.permute.xlu0 %1447
    %1451 = vrot.lane.b32.xlu0 %v345, 48
    %v1452 = vpop.permute.xlu0 %1451
    %1453 = vrot.lane.b32.xlu0 %v346, 48
    %v1454 = vpop.permute.xlu0 %1453
    %v1457 = vsel %vm409, %v345, %v1440
    %v1458 = vsel %vm409, %v346, %v1442
    %v1459 = vsel %vm87, %v1457, %v1446
    %v1460 = vsel %vm87, %v1458, %v1448
    %v1461 = vsel %vm1436, %v1459, %v1452
    %v1462 = vsel %vm1436, %v1460, %v1454
    %v1463 = vlaneseq
    %v1464 = vshrl.u32 %v1463, 7
    %v1465 = vsub.s32 0, %v1464
    %v1466 = vrot.slane %v79, %v1465
    %v1467 = vmul.f32 %v1461, %v1466
    %v1468 = vmul.f32 %v1462, %v1466
    %v1469 = vadd.f32 %v1437, %v1467
    %v1470 = vadd.f32 %v1438, %v1468
    %v1471 = vsub.f32 0.0, %v192
    %v1472 = vsub.f32 0.0, %v198
    %v1473 = vmul.f32 %v1471, 1.442695
    %v1474 = vpow.pop %v1473
    %v1475 = vmul.f32 %v1472, 1.442695
    %v1476 = vpow.pop %v1475
    %v1477 = vadd.f32 %v1474, 1.0
    %v1478 = vadd.f32 %v1476, 1.0
    %v1479 = vrcp.pop %v1477
    %v1480 = vmul.f32 1.0, %v1479
    %v1481 = vrcp.pop %v1478
    %v1482 = vmul.f32 1.0, %v1481
    %v1483 = vmul.f32 %v192, %v1480
    %v1484 = vmul.f32 %v198, %v1482
    %v1485 = vmul.f32 %v1469, %v1483
    %v1486 = vmul.f32 %v1470, %v1484
    %v1487 = vmul.f32 %v1485, %v1485
    %v1488 = vmul.f32 %v1486, %v1486
    %vm1489 = vcmask 523264
    %v1490 = vsel %vm1489, %v1487, 0.0
    %1491 = vadd.xlane.f32.xlu0 %v1490
    %v1492 = vpop.xlane.xlu0 %1491
    %v1493 = vsel %vm1489, %v1488, 0.0
    %1494 = vadd.xlane.f32.xlu0 %v1493
    %v1495 = vpop.xlane.xlu0 %1494
    %v1496 = vrcp.pop 64.0
    %v1497 = vmul.f32 %v1492, %v1496
    %v1498 = vmul.f32 %v1495, %v1496
    %v1499 = vadd.f32 %v1497, 1e-05
    %v1500 = vadd.f32 %v1498, 1e-05
    %v1501 = vrsqrt.pop %v1499
    %v1502 = vrsqrt.pop %v1500
    %v1503 = vmul.f32 %v1485, %v1501
    %v1504 = vmul.f32 %v1486, %v1502
    %v1505 = vlaneseq
    %v1506 = vshrl.u32 %v1505, 7
    %v1507 = vsub.s32 0, %v1506
    %v1508 = vrot.slane %v75, %v1507
    %v1509 = vmul.f32 %v1503, %v1508
    %v1510 = vmul.f32 %v1504, %v1508
    %v1511 = vld [vmem:[#allocation7] sm:$0xff]
    %v1512 = vld [vmem:[#allocation7 + $0x8] sm:$0xff]
    %v1513 = vld [vmem:[#allocation7 + $0x10] sm:$0xff]
    %v1514 = vld [vmem:[#allocation7 + $0x18] sm:$0xff]
    %v1515 = vld [vmem:[#allocation7 + $0x20] sm:$0xff]
    %v1516 = vld [vmem:[#allocation7 + $0x28] sm:$0xff]
    %v1517 = vld [vmem:[#allocation7 + $0x30] sm:$0xff]
    %v1518 = vld [vmem:[#allocation7 + $0x38] sm:$0xff]
    %v1520 = vsel %vm1489, %v1509, 0
    %v1523 = vsel %vm1489, %v1510, 0
    %1525 = vmatprep.subr.mxu0 0.0
    %1526 = vmatpush1.msra.mxu0 %v1511
    %1527 = vmatprep.subr.mxu0 0.0
    %1528 = vmatpush1.msra.mxu0 %v1512
    %1529 = vmatprep.subr.mxu0 0.0
    %1530 = vmatpush1.msra.mxu0 %v1513
    %1531 = vmatprep.subr.mxu0 0.0
    %1532 = vmatpush1.msra.mxu0 %v1514
    %1533 = vmatprep.subr.mxu0 0.0
    %1534 = vmatpush1.msra.mxu0 %v1515
    %1535 = vmatprep.subr.mxu0 0.0
    %1536 = vmatpush1.msra.mxu0 %v1516
    %1537 = vmatprep.subr.mxu0 0.0
    %1538 = vmatpush1.msra.mxu0 %v1517
    %1539 = vmatprep.subr.mxu0 0.0
    %1540 = vmatpush1.msra.mxu0 %v1518
    %1541 = vmatprep.subr.mxu0 0.0
    %1542 = vmatpush1.msra.mxu0 0.0
    %1543 = vmatprep.subr.mxu0 0.0
    %1544 = vmatpush1.msra.mxu0 0.0
    %1545 = vmatprep.subr.mxu0 0.0
    %1546 = vmatpush1.msra.mxu0 0.0
    %1547 = vmatprep.subr.mxu0 0.0
    %1548 = vmatpush1.msra.mxu0 0.0
    %1549 = vmatprep.subr.mxu0 0.0
    %1550 = vmatpush1.msra.mxu0 0.0
    %1551 = vmatprep.subr.mxu0 0.0
    %1552 = vmatpush1.msra.mxu0 0.0
    %1553 = vmatprep.subr.mxu0 0.0
    %1554 = vmatpush1.msra.mxu0 0.0
    %1555 = vmatprep.subr.mxu0 0.0
    %1556 = vmatpush1.msra.mxu0 0.0
    %1557 = vmatprep.subr.mxu0 0.0
    %1558 = vmatpush1.msra.mxu0 0.0
    %1559 = vmatprep.subr.mxu0 0.0
    %1560 = vmatpush1.msra.mxu0 0.0
    %1561 = vmatprep.subr.mxu0 0.0
    %1562 = vmatpush1.msra.mxu0 0.0
    %1563 = vmatprep.subr.mxu0 0.0
    %1564 = vmatpush1.msra.mxu0 0.0
    %1565 = vmatprep.subr.mxu0 0.0
    %1566 = vmatpush1.msra.mxu0 0.0
    %1567 = vmatprep.subr.mxu0 0.0
    %1568 = vmatpush1.msra.mxu0 0.0
    %1569 = vmatprep.subr.mxu0 0.0
    %1570 = vmatpush1.msra.mxu0 0.0
    %1571 = vmatprep.subr.mxu0 0.0
    %1572 = vmatpush1.msra.mxu0 0.0
    %1573 = vmatprep.subr.mxu0 0.0
    %1574 = vmatpush1.msra.mxu0 0.0
    %1575 = vmatprep.subr.mxu0 0.0
    %1576 = vmatpush1.msra.mxu0 0.0
    %1577 = vmatprep.subr.mxu0 0.0
    %1578 = vmatpush1.msra.mxu0 0.0
    %1579 = vmatprep.subr.mxu0 0.0
    %1580 = vmatpush1.msra.mxu0 0.0
    %1581 = vmatprep.subr.mxu0 0.0
    %1582 = vmatpush1.msra.mxu0 0.0
    %1583 = vmatprep.subr.mxu0 0.0
    %1584 = vmatpush1.msra.mxu0 0.0
    %1585 = vmatprep.subr.mxu0 0.0
    %1586 = vmatpush1.msra.mxu0 0.0
    %1587 = vmatprep.subr.mxu0 0.0
    %1588 = vmatpush1.msra.mxu0 0.0
    %1589 = vmatprep.mubr.f32.mxu0 0.0
    %1590 = vmatmul.mubr.f32.gmra.mrb[0].mxu0 %v1520
    %v1591 = vpop.f32.mrb[0].mxu0
    %v1592 = vadd.f32 0.0, %v1591
    %v1593 = vpop.f32.mrb[0].mxu0
    %1594 = vmatprep.mubr.f32.mxu0 0.0
    %1595 = vmatmul.mubr.f32.gmra.mrb[0].mxu0 %v1523
    %v1596 = vpop.f32.mrb[0].mxu0
    %v1597 = vadd.f32 0.0, %v1596
    %v1598 = vpop.f32.mrb[0].mxu0
    %1599 = vdwg.mxu0
    %v1600 = vadd.f32 %v83, %v1592
    %v1601 = vadd.f32 %v84, %v1597
    %v1602 = vmul.f32 %v1600, %v1600
    %v1603 = vmul.f32 %v1601, %v1601
    %v1604 = vsel %vm87, %v1602, 0.0
    %1605 = vadd.xlane.f32.xlu0 %v1604
    %v1606 = vpop.xlane.xlu0 %1605
    %v1607 = vsel %vm87, %v1603, 0.0
    %1608 = vadd.xlane.f32.xlu0 %v1607
    %v1609 = vpop.xlane.xlu0 %1608
    %v1610 = vmul.f32 %v1606, %v94
    %v1611 = vmul.f32 %v1609, %v94
    %v1612 = vadd.f32 %v1610, 1e-05
    %v1613 = vadd.f32 %v1611, 1e-05
    %v1614 = vrsqrt.pop %v1612
    %v1615 = vrsqrt.pop %v1613
    %v1616 = vmul.f32 %v1600, %v1614
    %v1617 = vmul.f32 %v1601, %v1615
    %v1618 = vlaneseq
    %v1619 = vshrl.u32 %v1618, 7
    %v1620 = vsub.s32 0, %v1619
    %v1621 = vrot.slane %v74, %v1620
    %v1622 = vmul.f32 %v1616, %v1621
    %v1623 = vmul.f32 %v1617, %v1621
    %v1624 = vld [vmem:[#allocation5 + $0x10] sm:$0xff]
    %v1625 = vld [vmem:[#allocation5 + $0x28] sm:$0xff]
    %v1626 = vld [vmem:[#allocation5 + $0x40] sm:$0xff]
    %v1627 = vld [vmem:[#allocation5 + $0x58] sm:$0xff]
    %v1629 = vsel %vm87, %v1622, 0
    %v1632 = vsel %vm87, %v1623, 0
    %1634 = vmatprep.subr.mxu0 0.0
    %1635 = vmatpush1.msra.mxu0 %v1624
    %1636 = vmatprep.subr.mxu0 0.0
    %1637 = vmatpush1.msra.mxu0 %v1625
    %1638 = vmatprep.subr.mxu0 0.0
    %1639 = vmatpush1.msra.mxu0 %v1626
    %1640 = vmatprep.subr.mxu0 0.0
    %1641 = vmatpush1.msra.mxu0 %v1627
    %1642 = vmatprep.subr.mxu0 0.0
    %1643 = vmatpush1.msra.mxu0 0.0
    %1644 = vmatprep.subr.mxu0 0.0
    %1645 = vmatpush1.msra.mxu0 0.0
    %1646 = vmatprep.subr.mxu0 0.0
    %1647 = vmatpush1.msra.mxu0 0.0
    %1648 = vmatprep.subr.mxu0 0.0
    %1649 = vmatpush1.msra.mxu0 0.0
    %1650 = vmatprep.subr.mxu0 0.0
    %1651 = vmatpush1.msra.mxu0 0.0
    %1652 = vmatprep.subr.mxu0 0.0
    %1653 = vmatpush1.msra.mxu0 0.0
    %1654 = vmatprep.subr.mxu0 0.0
    %1655 = vmatpush1.msra.mxu0 0.0
    %1656 = vmatprep.subr.mxu0 0.0
    %1657 = vmatpush1.msra.mxu0 0.0
    %1658 = vmatprep.subr.mxu0 0.0
    %1659 = vmatpush1.msra.mxu0 0.0
    %1660 = vmatprep.subr.mxu0 0.0
    %1661 = vmatpush1.msra.mxu0 0.0
    %1662 = vmatprep.subr.mxu0 0.0
    %1663 = vmatpush1.msra.mxu0 0.0
    %1664 = vmatprep.subr.mxu0 0.0
    %1665 = vmatpush1.msra.mxu0 0.0
    %1666 = vmatprep.subr.mxu0 0.0
    %1667 = vmatpush1.msra.mxu0 0.0
    %1668 = vmatprep.subr.mxu0 0.0
    %1669 = vmatpush1.msra.mxu0 0.0
    %1670 = vmatprep.subr.mxu0 0.0
    %1671 = vmatpush1.msra.mxu0 0.0
    %1672 = vmatprep.subr.mxu0 0.0
    %1673 = vmatpush1.msra.mxu0 0.0
    %1674 = vmatprep.subr.mxu0 0.0
    %1675 = vmatpush1.msra.mxu0 0.0
    %1676 = vmatprep.subr.mxu0 0.0
    %1677 = vmatpush1.msra.mxu0 0.0
    %1678 = vmatprep.subr.mxu0 0.0
    %1679 = vmatpush1.msra.mxu0 0.0
    %1680 = vmatprep.subr.mxu0 0.0
    %1681 = vmatpush1.msra.mxu0 0.0
    %1682 = vmatprep.subr.mxu0 0.0
    %1683 = vmatpush1.msra.mxu0 0.0
    %1684 = vmatprep.subr.mxu0 0.0
    %1685 = vmatpush1.msra.mxu0 0.0
    %1686 = vmatprep.subr.mxu0 0.0
    %1687 = vmatpush1.msra.mxu0 0.0
    %1688 = vmatprep.subr.mxu0 0.0
    %1689 = vmatpush1.msra.mxu0 0.0
    %1690 = vmatprep.subr.mxu0 0.0
    %1691 = vmatpush1.msra.mxu0 0.0
    %1692 = vmatprep.subr.mxu0 0.0
    %1693 = vmatpush1.msra.mxu0 0.0
    %1694 = vmatprep.subr.mxu0 0.0
    %1695 = vmatpush1.msra.mxu0 0.0
    %1696 = vmatprep.subr.mxu0 0.0
    %1697 = vmatpush1.msra.mxu0 0.0
    %1698 = vmatprep.mubr.f32.mxu0 0.0
    %1699 = vmatmul.mubr.f32.gmra.mrb[0].mxu0 %v1629
    %v1700 = vpop.f32.mrb[0].mxu0
    %v1701 = vadd.f32 0.0, %v1700
    %v1702 = vpop.f32.mrb[0].mxu0
    %1703 = vmatprep.mubr.f32.mxu0 0.0
    %1704 = vmatmul.mubr.f32.gmra.mrb[0].mxu0 %v1632
    %v1705 = vpop.f32.mrb[0].mxu0
    %v1706 = vadd.f32 0.0, %v1705
    %v1707 = vpop.f32.mrb[0].mxu0
    %1708 = vdwg.mxu0
    %v1709 = vsub.f32 0.0, %v1701
    %v1710 = vsub.f32 0.0, %v1706
    %v1711 = vmul.f32 %v1709, 1.442695
    %v1712 = vpow.pop %v1711
    %v1713 = vmul.f32 %v1710, 1.442695
    %v1714 = vpow.pop %v1713
    %v1715 = vadd.f32 %v1712, 1.0
    %v1716 = vadd.f32 %v1714, 1.0
    %v1717 = vrcp.pop %v1715
    %v1718 = vmul.f32 1.0, %v1717
    %v1719 = vrcp.pop %v1716
    %v1720 = vmul.f32 1.0, %v1719
    %v1721 = vmul.f32 %v1701, %v1718
    %v1722 = vmul.f32 %v1706, %v1720
    %1725 = vrot.lane.b32.xlu0 %v1701, 64
    %v1726 = vpop.permute.xlu0 %1725
    %1727 = vrot.lane.b32.xlu0 %v1706, 64
    %v1728 = vpop.permute.xlu0 %1727
    %v1731 = vmul.f32 %v1721, %v1726
    %v1732 = vmul.f32 %v1722, %v1728
    %1741 = vrot.lane.b32.xlu0 %v1511, 96
    %v1742 = vpop.permute.xlu0 %1741
    %1743 = vrot.lane.b32.xlu0 %v1512, 96
    %v1744 = vpop.permute.xlu0 %1743
    %1745 = vrot.lane.b32.xlu0 %v1513, 96
    %v1746 = vpop.permute.xlu0 %1745
    %1747 = vrot.lane.b32.xlu0 %v1514, 96
    %v1748 = vpop.permute.xlu0 %1747
    %1749 = vrot.lane.b32.xlu0 %v1515, 96
    %v1750 = vpop.permute.xlu0 %1749
    %1751 = vrot.lane.b32.xlu0 %v1516, 96
    %v1752 = vpop.permute.xlu0 %1751
    %1753 = vrot.lane.b32.xlu0 %v1517, 96
    %v1754 = vpop.permute.xlu0 %1753
    %1755 = vrot.lane.b32.xlu0 %v1518, 96
    %v1756 = vpop.permute.xlu0 %1755
    %v1766 = vsel %vm1489, %v1731, 0
    %v1769 = vsel %vm1489, %v1732, 0
    %1771 = vmatprep.subr.mxu0 0.0
    %1772 = vmatpush1.msra.mxu0 %v1742
    %1773 = vmatprep.subr.mxu0 0.0
    %1774 = vmatpush1.msra.mxu0 %v1744
    %1775 = vmatprep.subr.mxu0 0.0
    %1776 = vmatpush1.msra.mxu0 %v1746
    %1777 = vmatprep.subr.mxu0 0.0
    %1778 = vmatpush1.msra.mxu0 %v1748
    %1779 = vmatprep.subr.mxu0 0.0
    %1780 = vmatpush1.msra.mxu0 %v1750
    %1781 = vmatprep.subr.mxu0 0.0
    %1782 = vmatpush1.msra.mxu0 %v1752
    %1783 = vmatprep.subr.mxu0 0.0
    %1784 = vmatpush1.msra.mxu0 %v1754
    %1785 = vmatprep.subr.mxu0 0.0
    %1786 = vmatpush1.msra.mxu0 %v1756
    %1787 = vmatprep.subr.mxu0 0.0
    %1788 = vmatpush1.msra.mxu0 0.0
    %1789 = vmatprep.subr.mxu0 0.0
    %1790 = vmatpush1.msra.mxu0 0.0
    %1791 = vmatprep.subr.mxu0 0.0
    %1792 = vmatpush1.msra.mxu0 0.0
    %1793 = vmatprep.subr.mxu0 0.0
    %1794 = vmatpush1.msra.mxu0 0.0
    %1795 = vmatprep.subr.mxu0 0.0
    %1796 = vmatpush1.msra.mxu0 0.0
    %1797 = vmatprep.subr.mxu0 0.0
    %1798 = vmatpush1.msra.mxu0 0.0
    %1799 = vmatprep.subr.mxu0 0.0
    %1800 = vmatpush1.msra.mxu0 0.0
    %1801 = vmatprep.subr.mxu0 0.0
    %1802 = vmatpush1.msra.mxu0 0.0
    %1803 = vmatprep.subr.mxu0 0.0
    %1804 = vmatpush1.msra.mxu0 0.0
    %1805 = vmatprep.subr.mxu0 0.0
    %1806 = vmatpush1.msra.mxu0 0.0
    %1807 = vmatprep.subr.mxu0 0.0
    %1808 = vmatpush1.msra.mxu0 0.0
    %1809 = vmatprep.subr.mxu0 0.0
    %1810 = vmatpush1.msra.mxu0 0.0
    %1811 = vmatprep.subr.mxu0 0.0
    %1812 = vmatpush1.msra.mxu0 0.0
    %1813 = vmatprep.subr.mxu0 0.0
    %1814 = vmatpush1.msra.mxu0 0.0
    %1815 = vmatprep.subr.mxu0 0.0
    %1816 = vmatpush1.msra.mxu0 0.0
    %1817 = vmatprep.subr.mxu0 0.0
    %1818 = vmatpush1.msra.mxu0 0.0
    %1819 = vmatprep.subr.mxu0 0.0
    %1820 = vmatpush1.msra.mxu0 0.0
    %1821 = vmatprep.subr.mxu0 0.0
    %1822 = vmatpush1.msra.mxu0 0.0
    %1823 = vmatprep.subr.mxu0 0.0
    %1824 = vmatpush1.msra.mxu0 0.0
    %1825 = vmatprep.subr.mxu0 0.0
    %1826 = vmatpush1.msra.mxu0 0.0
    %1827 = vmatprep.subr.mxu0 0.0
    %1828 = vmatpush1.msra.mxu0 0.0
    %1829 = vmatprep.subr.mxu0 0.0
    %1830 = vmatpush1.msra.mxu0 0.0
    %1831 = vmatprep.subr.mxu0 0.0
    %1832 = vmatpush1.msra.mxu0 0.0
    %1833 = vmatprep.subr.mxu0 0.0
    %1834 = vmatpush1.msra.mxu0 0.0
    %1835 = vmatprep.mubr.f32.mxu0 0.0
    %1836 = vmatmul.mubr.f32.gmra.mrb[0].mxu0 %v1766
    %v1837 = vpop.f32.mrb[0].mxu0
    %v1838 = vadd.f32 0.0, %v1837
    %v1839 = vpop.f32.mrb[0].mxu0
    %1840 = vmatprep.mubr.f32.mxu0 0.0
    %1841 = vmatmul.mubr.f32.gmra.mrb[0].mxu0 %v1769
    %v1842 = vpop.f32.mrb[0].mxu0
    %v1843 = vadd.f32 0.0, %v1842
    %v1844 = vpop.f32.mrb[0].mxu0
    %1845 = vdwg.mxu0
    %v1846 = vadd.f32 %v1600, %v1838
    %v1847 = vadd.f32 %v1601, %v1843
    %1848 = vst.msk [vmem:[#allocation10] sm:$0xff] %vm87, %v1846
    %1849 = vst.msk [vmem:[#allocation10 + $0x8] sm:$0xff] %vm87, %v1847
    // Predicated region
    $region34: #{tpu_custom_call.1} parent=1 // pred_check
      _
    $region35: #{tpu_custom_call.1} parent=1 // pred_check_branch
      %1851 = sbr.rel (0) target = $region37
    $region36: #{tpu_custom_call.1} parent=1 // pred_region
      %s1853 = ssub.s32 256, 256
      %1854 = vsyncadd [#allocation4], %s1853
      %s1855 = sshll.u32 [#allocation10], 4
      %s1856 = int_to_ptr.vmem [resolvable:$true] %s1855
      %1861 = dma.vmem_to_hbm [thread:$0]  %s1856, 256, %s4, [#allocation4], 128, 128, 8
    $region37: #{tpu_custom_call.1} parent=1 // pred_fallthru
      _
    // Predicated region
    $region38: #{tpu_custom_call.1} parent=1 // pred_check
      _
    $region39: #{tpu_custom_call.1} parent=1 // pred_check_branch
      %1863 = sbr.rel (0) target = $region41
    $region40: #{tpu_custom_call.1} parent=1 // pred_region
      %1864 = dma.done [#allocation4], 256
    $region41: #{tpu_custom_call.1} parent=1 // pred_fallthru
      _
    %1865 = vsyncpa [#allocation3], 1
    %1866 = vsyncpa [#allocation6], 1
    %1867 = vsyncpa [#allocation9], 1
    %1868 = vsyncpa [#allocation4], 1

</llo_original>
